<compile_context>
chip_gen: v7x
topology: tpu7x:2x2x1
jax: 0.10.0
libtpu: 0.0.40
codegen_flags: <defaults>
</compile_context>

<pallas_src>
import functools

import jax
import jax.numpy as jnp
from jax import lax
from jax.experimental import pallas as pl
from jax.experimental.pallas import tpu as pltpu

EPS = 1e-12


def _round_up(a, m):
    return (a + m - 1) // m * m


# ------------------------------ fused kernel --------------------------------

def _fused_sn_conv_kernel(x_ref, w_ref, u_ref, b_ref, y_ref, wn_ref, un_ref, *,
                          oc, ic, kh, kw, wp, l_out):
    """Spectral norm + conv for one batch image (one grid step).

    x_ref : (1, IC, Lp)  bf16  padded activation plane, flat Hp*Wp, lane-padded
    w_ref : (OC, K)      f32   w_bar with tap-major columns ((kh,kw) outer, ic inner)
    u_ref : (1, OC)      f32   left singular-vector estimate
    b_ref : (OC, 1)      f32   conv bias
    y_ref : (1, OC, Lo)  f32   conv output, flat with padded-row stride Wp
    wn_ref: (1, OC, K)   f32   w_bar / sigma (tap-major layout)
    un_ref: (1, 1, OC)   f32   updated u
    """
    # --- spectral normalization (permutation of weight columns does not change
    #     norms / sigma, so the tap-major layout is fine here too).
    w = w_ref[...].astype(jnp.float32)                                 # (OC, K)
    u = u_ref[...]                                                     # (1, OC)

    v = jnp.dot(u, w, preferred_element_type=jnp.float32)              # (1, K)
    v = v * (1.0 / (jnp.sqrt(jnp.sum(v * v)) + EPS))
    # W @ v: contract last axes of both operands (no in-kernel transpose of w).
    # TODO(synk): for large K switch to pl.dot(v, w, trans_b=True).
    wv = lax.dot_general(v, w, (((1,), (1,)), ((), ())),
                         preferred_element_type=jnp.float32)            # (1, OC)
    u_new = wv * (1.0 / (jnp.sqrt(jnp.sum(wv * wv)) + EPS))
    sigma = jnp.sum(u_new * wv)
    w_n = w * (1.0 / sigma)                                             # (OC, K)

    wn_ref[0] = w_n.astype(wn_ref.dtype)
    un_ref[0] = u_new

    # --- conv2d: KH*KW shifted (OC, IC) x (IC, Lo) matmuls, accumulated in f32.
    #     Each tap (dh, dw) is a constant lane offset dh*Wp + dw into the flat
    #     padded plane; no im2col patches are ever materialized.
    w_bf = w_n.astype(jnp.bfloat16)
    x = x_ref[0]                                                        # (IC, Lp)
    acc = jnp.zeros((oc, l_out), jnp.float32)
    for dh in range(kh):
        for dw in range(kw):
            t = dh * kw + dw
            off = dh * wp + dw
            x_t = x[:, off:off + l_out]                                 # (IC, Lo)
            w_t = w_bf[:, t * ic:(t + 1) * ic]                          # (OC, IC)
            acc = acc + jnp.dot(w_t, x_t, preferred_element_type=jnp.float32)
    y_ref[0] = (acc + b_ref[...]).astype(y_ref.dtype)


# -------------------------------- wrapper ------------------------------------

def spectral_norm_conv2d(x_nchw, w_bar_oihw, bias, u, *, stride=1, padding=1):
    """Forward of SpectralNorm(Conv2d): returns (y, normalized weight, new u)."""
    # TODO(synk): only the wrapped module's stride=1 configuration is implemented.
    assert stride == 1, "only stride=1 is supported"
    N, IC, H, W = x_nchw.shape
    OC, ICw, KH, KW = w_bar_oihw.shape
    assert IC == ICw
    K = IC * KH * KW
    Hp, Wp = H + 2 * padding, W + 2 * padding
    OH, OW = Hp - KH + 1, Wp - KW + 1
    assert OH > 0 and OW > 0

    L = Hp * Wp                                   # flat padded input plane
    L_OUT = _round_up(OH * Wp, 128)               # lane-dense flat output plane
    off_max = (KH - 1) * Wp + (KW - 1)            # largest tap offset
    L_IN = _round_up(max(L, off_max + L_OUT), 128)  # lane-dense flat input plane

    # Single zero-pad + flatten of the activation (no 9x im2col HBM expansion).
    xp = jnp.pad(x_nchw.astype(jnp.bfloat16),
                 ((0, 0), (0, 0), (padding, padding), (padding, padding)))
    x_flat = jnp.pad(xp.reshape(N, IC, L), ((0, 0), (0, 0), (0, L_IN - L)))

    # Tap-major weight columns ((kh, kw) outer, ic inner) so each tap's (OC, IC)
    # block is a contiguous lane slice inside the kernel.
    w_perm = jnp.transpose(w_bar_oihw, (0, 2, 3, 1)).reshape(OC, K)
    u2 = u.reshape(1, OC).astype(jnp.float32)
    b2 = bias.reshape(OC, 1).astype(jnp.float32)

    kernel = functools.partial(_fused_sn_conv_kernel, oc=OC, ic=IC, kh=KH,
                               kw=KW, wp=Wp, l_out=L_OUT)

    # TODO(synk): for large H*W the per-image plane should be split into
    # halo-overlapped spatial tiles via a manual-DMA pipeline; blocked
    # BlockSpec indexing cannot express overlapping windows.
    y_flat, w_norm_perm, u_new = pl.pallas_call(
        kernel,
        out_shape=(jax.ShapeDtypeStruct((N, OC, L_OUT), jnp.float32),
                   jax.ShapeDtypeStruct((N, OC, K), w_bar_oihw.dtype),
                   jax.ShapeDtypeStruct((N, 1, OC), jnp.float32)),
        grid=(N,),
        in_specs=[pl.BlockSpec((1, IC, L_IN), lambda n: (n, 0, 0)),
                  pl.BlockSpec((OC, K), lambda n: (0, 0)),
                  pl.BlockSpec((1, OC), lambda n: (0, 0)),
                  pl.BlockSpec((OC, 1), lambda n: (0, 0))],
        out_specs=(pl.BlockSpec((1, OC, L_OUT), lambda n: (n, 0, 0)),
                   pl.BlockSpec((1, OC, K), lambda n: (n, 0, 0)),
                   pl.BlockSpec((1, 1, OC), lambda n: (n, 0, 0))),
        compiler_params=pltpu.CompilerParams(
            dimension_semantics=("parallel",)),
    )(x_flat, w_perm, u2, b2)

    # Cheap epilogue on output-sized / tiny tensors: drop the Wp-OW junk
    # columns per row and un-permute the 1.2 KB weight back to OIHW.
    y = y_flat[:, :, :OH * Wp].reshape(N, OC, OH, Wp)[:, :, :, :OW]
    w_norm = w_norm_perm[0].reshape(OC, KH, KW, IC).transpose(0, 3, 1, 2)
    return y, w_norm, u_new[0, 0]


# ------------------------------- reference -----------------------------------

def _l2normalize(v, eps=EPS):
    return v / (jnp.linalg.norm(v) + eps)


def _reference(x, w_bar, bias, u):
    OC = w_bar.shape[0]
    w_flat = w_bar.reshape(OC, -1)
    v = _l2normalize(w_flat.T @ u)
    u_new = _l2normalize(w_flat @ v)
    sigma = jnp.dot(u_new, w_flat @ v)
    w_norm = w_bar / sigma
    y = lax.conv_general_dilated(
        x, w_norm, window_strides=(1, 1), padding=((1, 1), (1, 1)),
        dimension_numbers=('NCHW', 'OIHW', 'NCHW'))
    return y + bias[None, :, None, None], w_norm, u_new


# --------------------------------- main ---------------------------------------

if __name__ == "__main__":
    key = jax.random.PRNGKey(0)
    k_x, k_w, k_b, k_u, k_v = jax.random.split(key, 5)

    # Wrapped module: Conv2d(in=4, out=8, kernel=3, stride=1, padding=1)
    N, C, H, W = 2, 4, 16, 16
    OC, KH, KW = 8, 3, 3

    x = jax.random.normal(k_x, (N, C, H, W), dtype=jnp.float32)
    w_bar = jax.random.normal(k_w, (OC, C, KH, KW), dtype=jnp.float32) * 0.1
    bias = jax.random.normal(k_b, (OC,), dtype=jnp.float32) * 0.01

    # SpectralNorm._make_params: u ~ N(0,1) of size height, l2-normalized.
    u = _l2normalize(jax.random.normal(k_u, (OC,), dtype=jnp.float32))
    # The v parameter exists in the module but is overwritten before first use
    # (power_iterations=1), so it is not an input here.
    _v_unused = _l2normalize(
        jax.random.normal(k_v, (C * KH * KW,), dtype=jnp.float32))

    conv_sn = jax.jit(spectral_norm_conv2d)
    out, w_norm, u_new = conv_sn(x, w_bar, bias, u)
    out = jax.block_until_ready(out)

    ref_out, ref_w, ref_u = _reference(x, w_bar, bias, u)
    assert out.shape == (N, OC, H, W)
    # Weight / u path is computed entirely in f32 -> tight check.
    assert jnp.allclose(w_norm, ref_w, atol=1e-3, rtol=1e-3), (
        float(jnp.max(jnp.abs(w_norm - ref_w))))
    assert jnp.allclose(u_new, ref_u, atol=1e-3, rtol=1e-3), (
        float(jnp.max(jnp.abs(u_new - ref_u))))
    # Conv uses bf16 MXU operands (f32 accumulation) -> bf16-level tolerance
    # against the pure-f32 reference conv.
    assert jnp.allclose(out, ref_out, atol=2e-2, rtol=2e-2), (
        float(jnp.max(jnp.abs(out - ref_out))))

    print("KERNEL_OK")
</pallas_src>

<mosaic_0001>
module attributes {stable_mosaic.version = 11 : i64} {
  func.func @_fused_sn_conv_kernel(%arg0: i32, %arg1: memref<1x4x512xbf16, #tpu.memory_space<vmem>>, %arg2: memref<8x36xf32, #tpu.memory_space<vmem>>, %arg3: memref<1x8xf32, #tpu.memory_space<vmem>>, %arg4: memref<8x1xf32, #tpu.memory_space<vmem>>, %arg5: memref<1x8x384xf32, #tpu.memory_space<vmem>>, %arg6: memref<1x8x36xf32, #tpu.memory_space<vmem>>, %arg7: memref<1x1x8xf32, #tpu.memory_space<vmem>>) attributes {dimension_semantics = [#tpu.dimension_semantics<parallel>], iteration_bounds = array<i64: 2>, scalar_prefetch = 0 : i64, scratch_operands = 0 : i64, tpu.core_type = #tpu.core_type<tc>, window_params = [{transform_indices = @transform_0, window_bounds = array<i64: 1, 4, 512>}, {pipeline_mode = #tpu.pipeline_mode<synchronous>, transform_indices = @transform_1, window_bounds = array<i64: 8, 36>}, {pipeline_mode = #tpu.pipeline_mode<synchronous>, transform_indices = @transform_2, window_bounds = array<i64: 1, 8>}, {pipeline_mode = #tpu.pipeline_mode<synchronous>, transform_indices = @transform_3, window_bounds = array<i64: 8, 1>}, {transform_indices = @transform_4, window_bounds = array<i64: 1, 8, 384>}, {transform_indices = @transform_5, window_bounds = array<i64: 1, 8, 36>}, {transform_indices = @transform_6, window_bounds = array<i64: 1, 1, 8>}]} {
    %c0 = arith.constant 0 : index
    %c0_0 = arith.constant 0 : index
    %0 = vector.load %arg2[%c0, %c0_0] : memref<8x36xf32, #tpu.memory_space<vmem>>, vector<8x36xf32>
    %c0_1 = arith.constant 0 : index
    %c0_2 = arith.constant 0 : index
    %1 = vector.load %arg3[%c0_1, %c0_2] : memref<1x8xf32, #tpu.memory_space<vmem>>, vector<1x8xf32>
    %cst = arith.constant dense<0.000000e+00> : vector<1x36xf32>
    %2 = tpu.matmul %1, %0, %cst {dimension_numbers = #tpu.dot_dimension_numbers<[1], [0], [0], [1], [0, 0, 1, 1], [], []>} : vector<1x8xf32>, vector<8x36xf32>, vector<1x36xf32> -> vector<1x36xf32>
    %3 = arith.mulf %2, %2 : vector<1x36xf32>
    %4 = vector.shape_cast %3 : vector<1x36xf32> to vector<1x1x36xf32>
    %cst_3 = arith.constant dense<0.000000e+00> : vector<1xf32>
    %5 = vector.multi_reduction <add>, %4, %cst_3 [1, 2] : vector<1x1x36xf32> to vector<1xf32>
    %6 = vector.shape_cast %5 : vector<1xf32> to vector<1x1x1xf32>
    %7 = vector.extract %6[0, 0, 0] : f32 from vector<1x1x1xf32>
    %8 = math.sqrt %7 : f32
    %cst_4 = arith.constant 9.99999996E-13 : f32
    %9 = arith.addf %8, %cst_4 : f32
    %cst_5 = arith.constant 1.000000e+00 : f32
    %10 = arith.divf %cst_5, %9 : f32
    %11 = vector.broadcast %10 : f32 to vector<1x36xf32>
    %12 = arith.mulf %2, %11 : vector<1x36xf32>
    %cst_6 = arith.constant dense<0.000000e+00> : vector<1x8xf32>
    %13 = tpu.matmul %12, %0, %cst_6 {dimension_numbers = #tpu.dot_dimension_numbers<[1], [1], [0], [0], [0, 0, 1, 0], [], []>} : vector<1x36xf32>, vector<8x36xf32>, vector<1x8xf32> -> vector<1x8xf32>
    %14 = arith.mulf %13, %13 : vector<1x8xf32>
    %15 = vector.shape_cast %14 : vector<1x8xf32> to vector<1x1x8xf32>
    %cst_7 = arith.constant dense<0.000000e+00> : vector<1xf32>
    %16 = vector.multi_reduction <add>, %15, %cst_7 [1, 2] : vector<1x1x8xf32> to vector<1xf32>
    %17 = vector.shape_cast %16 : vector<1xf32> to vector<1x1x1xf32>
    %18 = vector.extract %17[0, 0, 0] : f32 from vector<1x1x1xf32>
    %19 = math.sqrt %18 : f32
    %cst_8 = arith.constant 9.99999996E-13 : f32
    %20 = arith.addf %19, %cst_8 : f32
    %cst_9 = arith.constant 1.000000e+00 : f32
    %21 = arith.divf %cst_9, %20 : f32
    %22 = vector.broadcast %21 : f32 to vector<1x8xf32>
    %23 = arith.mulf %13, %22 : vector<1x8xf32>
    %24 = arith.mulf %23, %13 : vector<1x8xf32>
    %25 = vector.shape_cast %24 : vector<1x8xf32> to vector<1x1x8xf32>
    %cst_10 = arith.constant dense<0.000000e+00> : vector<1xf32>
    %26 = vector.multi_reduction <add>, %25, %cst_10 [1, 2] : vector<1x1x8xf32> to vector<1xf32>
    %27 = vector.shape_cast %26 : vector<1xf32> to vector<1x1x1xf32>
    %28 = vector.extract %27[0, 0, 0] : f32 from vector<1x1x1xf32>
    %cst_11 = arith.constant 1.000000e+00 : f32
    %29 = arith.divf %cst_11, %28 : f32
    %30 = vector.broadcast %29 : f32 to vector<8x36xf32>
    %31 = arith.mulf %0, %30 : vector<8x36xf32>
    %c0_12 = arith.constant 0 : index
    %c0_13 = arith.constant 0 : index
    %c0_14 = arith.constant 0 : index
    %32 = vector.load %arg6[%c0_12, %c0_13, %c0_14] : memref<1x8x36xf32, #tpu.memory_space<vmem>>, vector<1x8x36xf32>
    %33 = vector.shape_cast %32 : vector<1x8x36xf32> to vector<8x36xf32>
    %34 = vector.shape_cast %31 : vector<8x36xf32> to vector<1x8x36xf32>
    tpu.vector_store %arg6[%c0_12, %c0_13, %c0_14], %34 {strides = array<i32>} : memref<1x8x36xf32, #tpu.memory_space<vmem>>, vector<1x8x36xf32>,
    %c0_15 = arith.constant 0 : index
    %c0_16 = arith.constant 0 : index
    %c0_17 = arith.constant 0 : index
    %35 = vector.load %arg7[%c0_15, %c0_16, %c0_17] : memref<1x1x8xf32, #tpu.memory_space<vmem>>, vector<1x1x8xf32>
    %36 = vector.shape_cast %35 : vector<1x1x8xf32> to vector<1x8xf32>
    %37 = vector.shape_cast %23 : vector<1x8xf32> to vector<1x1x8xf32>
    tpu.vector_store %arg7[%c0_15, %c0_16, %c0_17], %37 {strides = array<i32>} : memref<1x1x8xf32, #tpu.memory_space<vmem>>, vector<1x1x8xf32>,
    %38 = arith.truncf %31 : vector<8x36xf32> to vector<8x36xbf16>
    %c0_18 = arith.constant 0 : index
    %c0_19 = arith.constant 0 : index
    %c0_20 = arith.constant 0 : index
    %39 = vector.load %arg1[%c0_18, %c0_19, %c0_20] : memref<1x4x512xbf16, #tpu.memory_space<vmem>>, vector<1x4x512xbf16>
    %40 = vector.shape_cast %39 : vector<1x4x512xbf16> to vector<4x512xbf16>
    %cst_21 = arith.constant 0.000000e+00 : f32
    %41 = vector.broadcast %cst_21 : f32 to vector<8x384xf32>
    %42 = vector.extract_strided_slice %40 {offsets = [0, 0], sizes = [4, 384], strides = [1, 1]} : vector<4x512xbf16> to vector<4x384xbf16>
    %43 = vector.extract_strided_slice %38 {offsets = [0, 0], sizes = [8, 4], strides = [1, 1]} : vector<8x36xbf16> to vector<8x4xbf16>
    %cst_22 = arith.constant dense<0.000000e+00> : vector<8x384xf32>
    %44 = tpu.matmul %43, %42, %cst_22 {dimension_numbers = #tpu.dot_dimension_numbers<[1], [0], [0], [1], [0, 0, 1, 1], [], []>} : vector<8x4xbf16>, vector<4x384xbf16>, vector<8x384xf32> -> vector<8x384xf32>
    %45 = arith.addf %41, %44 : vector<8x384xf32>
    %46 = vector.extract_strided_slice %40 {offsets = [0, 1], sizes = [4, 384], strides = [1, 1]} : vector<4x512xbf16> to vector<4x384xbf16>
    %47 = vector.extract_strided_slice %38 {offsets = [0, 4], sizes = [8, 4], strides = [1, 1]} : vector<8x36xbf16> to vector<8x4xbf16>
    %cst_23 = arith.constant dense<0.000000e+00> : vector<8x384xf32>
    %48 = tpu.matmul %47, %46, %cst_23 {dimension_numbers = #tpu.dot_dimension_numbers<[1], [0], [0], [1], [0, 0, 1, 1], [], []>} : vector<8x4xbf16>, vector<4x384xbf16>, vector<8x384xf32> -> vector<8x384xf32>
    %49 = arith.addf %45, %48 : vector<8x384xf32>
    %50 = vector.extract_strided_slice %40 {offsets = [0, 2], sizes = [4, 384], strides = [1, 1]} : vector<4x512xbf16> to vector<4x384xbf16>
    %51 = vector.extract_strided_slice %38 {offsets = [0, 8], sizes = [8, 4], strides = [1, 1]} : vector<8x36xbf16> to vector<8x4xbf16>
    %cst_24 = arith.constant dense<0.000000e+00> : vector<8x384xf32>
    %52 = tpu.matmul %51, %50, %cst_24 {dimension_numbers = #tpu.dot_dimension_numbers<[1], [0], [0], [1], [0, 0, 1, 1], [], []>} : vector<8x4xbf16>, vector<4x384xbf16>, vector<8x384xf32> -> vector<8x384xf32>
    %53 = arith.addf %49, %52 : vector<8x384xf32>
    %54 = vector.extract_strided_slice %40 {offsets = [0, 18], sizes = [4, 384], strides = [1, 1]} : vector<4x512xbf16> to vector<4x384xbf16>
    %55 = vector.extract_strided_slice %38 {offsets = [0, 12], sizes = [8, 4], strides = [1, 1]} : vector<8x36xbf16> to vector<8x4xbf16>
    %cst_25 = arith.constant dense<0.000000e+00> : vector<8x384xf32>
    %56 = tpu.matmul %55, %54, %cst_25 {dimension_numbers = #tpu.dot_dimension_numbers<[1], [0], [0], [1], [0, 0, 1, 1], [], []>} : vector<8x4xbf16>, vector<4x384xbf16>, vector<8x384xf32> -> vector<8x384xf32>
    %57 = arith.addf %53, %56 : vector<8x384xf32>
    %58 = vector.extract_strided_slice %40 {offsets = [0, 19], sizes = [4, 384], strides = [1, 1]} : vector<4x512xbf16> to vector<4x384xbf16>
    %59 = vector.extract_strided_slice %38 {offsets = [0, 16], sizes = [8, 4], strides = [1, 1]} : vector<8x36xbf16> to vector<8x4xbf16>
    %cst_26 = arith.constant dense<0.000000e+00> : vector<8x384xf32>
    %60 = tpu.matmul %59, %58, %cst_26 {dimension_numbers = #tpu.dot_dimension_numbers<[1], [0], [0], [1], [0, 0, 1, 1], [], []>} : vector<8x4xbf16>, vector<4x384xbf16>, vector<8x384xf32> -> vector<8x384xf32>
    %61 = arith.addf %57, %60 : vector<8x384xf32>
    %62 = vector.extract_strided_slice %40 {offsets = [0, 20], sizes = [4, 384], strides = [1, 1]} : vector<4x512xbf16> to vector<4x384xbf16>
    %63 = vector.extract_strided_slice %38 {offsets = [0, 20], sizes = [8, 4], strides = [1, 1]} : vector<8x36xbf16> to vector<8x4xbf16>
    %cst_27 = arith.constant dense<0.000000e+00> : vector<8x384xf32>
    %64 = tpu.matmul %63, %62, %cst_27 {dimension_numbers = #tpu.dot_dimension_numbers<[1], [0], [0], [1], [0, 0, 1, 1], [], []>} : vector<8x4xbf16>, vector<4x384xbf16>, vector<8x384xf32> -> vector<8x384xf32>
    %65 = arith.addf %61, %64 : vector<8x384xf32>
    %66 = vector.extract_strided_slice %40 {offsets = [0, 36], sizes = [4, 384], strides = [1, 1]} : vector<4x512xbf16> to vector<4x384xbf16>
    %67 = vector.extract_strided_slice %38 {offsets = [0, 24], sizes = [8, 4], strides = [1, 1]} : vector<8x36xbf16> to vector<8x4xbf16>
    %cst_28 = arith.constant dense<0.000000e+00> : vector<8x384xf32>
    %68 = tpu.matmul %67, %66, %cst_28 {dimension_numbers = #tpu.dot_dimension_numbers<[1], [0], [0], [1], [0, 0, 1, 1], [], []>} : vector<8x4xbf16>, vector<4x384xbf16>, vector<8x384xf32> -> vector<8x384xf32>
    %69 = arith.addf %65, %68 : vector<8x384xf32>
    %70 = vector.extract_strided_slice %40 {offsets = [0, 37], sizes = [4, 384], strides = [1, 1]} : vector<4x512xbf16> to vector<4x384xbf16>
    %71 = vector.extract_strided_slice %38 {offsets = [0, 28], sizes = [8, 4], strides = [1, 1]} : vector<8x36xbf16> to vector<8x4xbf16>
    %cst_29 = arith.constant dense<0.000000e+00> : vector<8x384xf32>
    %72 = tpu.matmul %71, %70, %cst_29 {dimension_numbers = #tpu.dot_dimension_numbers<[1], [0], [0], [1], [0, 0, 1, 1], [], []>} : vector<8x4xbf16>, vector<4x384xbf16>, vector<8x384xf32> -> vector<8x384xf32>
    %73 = arith.addf %69, %72 : vector<8x384xf32>
    %74 = vector.extract_strided_slice %40 {offsets = [0, 38], sizes = [4, 384], strides = [1, 1]} : vector<4x512xbf16> to vector<4x384xbf16>
    %75 = vector.extract_strided_slice %38 {offsets = [0, 32], sizes = [8, 4], strides = [1, 1]} : vector<8x36xbf16> to vector<8x4xbf16>
    %cst_30 = arith.constant dense<0.000000e+00> : vector<8x384xf32>
    %76 = tpu.matmul %75, %74, %cst_30 {dimension_numbers = #tpu.dot_dimension_numbers<[1], [0], [0], [1], [0, 0, 1, 1], [], []>} : vector<8x4xbf16>, vector<4x384xbf16>, vector<8x384xf32> -> vector<8x384xf32>
    %77 = arith.addf %73, %76 : vector<8x384xf32>
    %c0_31 = arith.constant 0 : index
    %c0_32 = arith.constant 0 : index
    %78 = vector.load %arg4[%c0_31, %c0_32] : memref<8x1xf32, #tpu.memory_space<vmem>>, vector<8x1xf32>
    %79 = vector.broadcast %78 : vector<8x1xf32> to vector<8x384xf32>
    %80 = arith.addf %77, %79 : vector<8x384xf32>
    %c0_33 = arith.constant 0 : index
    %c0_34 = arith.constant 0 : index
    %c0_35 = arith.constant 0 : index
    %81 = vector.load %arg5[%c0_33, %c0_34, %c0_35] : memref<1x8x384xf32, #tpu.memory_space<vmem>>, vector<1x8x384xf32>
    %82 = vector.shape_cast %81 : vector<1x8x384xf32> to vector<8x384xf32>
    %83 = vector.shape_cast %80 : vector<8x384xf32> to vector<1x8x384xf32>
    tpu.vector_store %arg5[%c0_33, %c0_34, %c0_35], %83 {strides = array<i32>} : memref<1x8x384xf32, #tpu.memory_space<vmem>>, vector<1x8x384xf32>,
    return
  }
  func.func @transform_0(%arg0: i32) -> (i32, i32, i32) {
    %c0_i32 = arith.constant 0 : i32
    %c0_i32_0 = arith.constant 0 : i32
    %c0_i32_1 = arith.constant 0 : i32
    return %arg0, %c0_i32, %c0_i32_0 : i32, i32, i32
  }
  func.func @transform_1(%arg0: i32) -> (i32, i32) {
    %c0_i32 = arith.constant 0 : i32
    %c0_i32_0 = arith.constant 0 : i32
    %c0_i32_1 = arith.constant 0 : i32
    return %c0_i32, %c0_i32_0 : i32, i32
  }
  func.func @transform_2(%arg0: i32) -> (i32, i32) {
    %c0_i32 = arith.constant 0 : i32
    %c0_i32_0 = arith.constant 0 : i32
    %c0_i32_1 = arith.constant 0 : i32
    return %c0_i32, %c0_i32_0 : i32, i32
  }
  func.func @transform_3(%arg0: i32) -> (i32, i32) {
    %c0_i32 = arith.constant 0 : i32
    %c0_i32_0 = arith.constant 0 : i32
    %c0_i32_1 = arith.constant 0 : i32
    return %c0_i32, %c0_i32_0 : i32, i32
  }
  func.func @transform_4(%arg0: i32) -> (i32, i32, i32) {
    %c0_i32 = arith.constant 0 : i32
    %c0_i32_0 = arith.constant 0 : i32
    %c0_i32_1 = arith.constant 0 : i32
    return %arg0, %c0_i32, %c0_i32_0 : i32, i32, i32
  }
  func.func @transform_5(%arg0: i32) -> (i32, i32, i32) {
    %c0_i32 = arith.constant 0 : i32
    %c0_i32_0 = arith.constant 0 : i32
    %c0_i32_1 = arith.constant 0 : i32
    return %arg0, %c0_i32, %c0_i32_0 : i32, i32, i32
  }
  func.func @transform_6(%arg0: i32) -> (i32, i32, i32) {
    %c0_i32 = arith.constant 0 : i32
    %c0_i32_0 = arith.constant 0 : i32
    %c0_i32_1 = arith.constant 0 : i32
    return %arg0, %c0_i32, %c0_i32_0 : i32, i32, i32
  }
}

</mosaic_0001>

<llo_original>
// kernel: squeeze.2
$region0: #{squeeze.2}
  %s0 = inlined_call_operand.vmem [shape: f32[1,8,36], index: 0, kind: input, shape index: {}]
  %s1 = inlined_call_operand.hbm [shape: f32[8,3,3,4], index: 1, kind: output, shape index: {}]
  $region1: #{squeeze.2} parent=0
    #allocation0 [shape = 'u8[18432]{0}', space=vmem, size = 0x4800, scoped, tag = 'operand span for operand 1']
    #allocation1 [shape = 's32[1]{0}', space=sflag, size = 0x4, scoped, tag = 'scoped memory for squeeze.2']
    #allocation2 [shape = 'u8[36864]{0}', space=vmem, size = 0x9000, scoped, tag = 'scoped mem for output reshape']
    %2 = vsyncpa [#allocation1], 0
    %v3 = vld [vmem:[%s0] sm:$0xff]
    %vm4 = vcmask 64512
    %5 = vst.msk [vmem:[#allocation2] sm:$0xf] %vm4, %v3
    %s6 = scalar_lea.vmem [#allocation2], 4
    %7 = vst.msk [vmem:[%s6] sm:$0xf0] %vm4, %v3
    %s8 = scalar_lea.vmem %s0, 8
    %v9 = vld [vmem:[%s8] sm:$0xff]
    %vm10 = vcmask 64512
    %s11 = scalar_lea.vmem [#allocation2], 16
    %12 = vst.msk [vmem:[%s11] sm:$0xf] %vm10, %v9
    %s13 = scalar_lea.vmem [#allocation2], 20
    %14 = vst.msk [vmem:[%s13] sm:$0xf0] %vm10, %v9
    %s15 = scalar_lea.vmem %s0, 16
    %v16 = vld [vmem:[%s15] sm:$0xff]
    %vm17 = vcmask 64512
    %s18 = scalar_lea.vmem [#allocation2], 32
    %19 = vst.msk [vmem:[%s18] sm:$0xf] %vm17, %v16
    %s20 = scalar_lea.vmem [#allocation2], 36
    %21 = vst.msk [vmem:[%s20] sm:$0xf0] %vm17, %v16
    %s22 = scalar_lea.vmem %s0, 24
    %v23 = vld [vmem:[%s22] sm:$0xff]
    %vm24 = vcmask 64512
    %s25 = scalar_lea.vmem [#allocation2], 48
    %26 = vst.msk [vmem:[%s25] sm:$0xf] %vm24, %v23
    %s27 = scalar_lea.vmem [#allocation2], 52
    %28 = vst.msk [vmem:[%s27] sm:$0xf0] %vm24, %v23
    %s29 = scalar_lea.vmem %s0, 32
    %v30 = vld [vmem:[%s29] sm:$0xf]
    %vm31 = vcmask 64512
    %s32 = scalar_lea.vmem [#allocation2], 64
    %33 = vst.msk [vmem:[%s32] sm:$0xf] %vm31, %v30
    %s35 = sshllo.u32 0, 4
    %v37 = vld [vmem:[#allocation2] sm:%s35]
    %s38 = sshllo.u32 0, 4
    %39 = vst [vmem:[#allocation0] sm:%s38] %v37
    %s40 = scalar_lea.vmem [#allocation2], 8
    %v41 = vld [vmem:[%s40] sm:%s35]
    %s42 = sshllo.u32 0, 4
    %s43 = scalar_lea.vmem [#allocation0], 4
    %44 = vst [vmem:[%s43] sm:%s42] %v41
    %s45 = scalar_lea.vmem [#allocation2], 16
    %v46 = vld [vmem:[%s45] sm:%s35]
    %s47 = sshllo.u32 0, 4
    %s48 = smul.addr 4, 2
    %s49 = scalar_lea.vmem [#allocation0], %s48
    %50 = vst [vmem:[%s49] sm:%s47] %v46
    %s51 = scalar_lea.vmem [#allocation2], 24
    %v52 = vld [vmem:[%s51] sm:%s35]
    %s53 = sshllo.u32 0, 4
    %s54 = smul.addr 4, 3
    %s55 = scalar_lea.vmem [#allocation0], %s54
    %56 = vst [vmem:[%s55] sm:%s53] %v52
    %s57 = scalar_lea.vmem [#allocation2], 32
    %v58 = vld [vmem:[%s57] sm:%s35]
    %s59 = sshllo.u32 0, 4
    %s60 = smul.addr 4, 4
    %s61 = scalar_lea.vmem [#allocation0], %s60
    %62 = vst [vmem:[%s61] sm:%s59] %v58
    %s63 = scalar_lea.vmem [#allocation2], 40
    %v64 = vld [vmem:[%s63] sm:%s35]
    %s65 = sshllo.u32 0, 4
    %s66 = smul.addr 4, 5
    %s67 = scalar_lea.vmem [#allocation0], %s66
    %68 = vst [vmem:[%s67] sm:%s65] %v64
    %s69 = scalar_lea.vmem [#allocation2], 48
    %v70 = vld [vmem:[%s69] sm:%s35]
    %s71 = sshllo.u32 0, 4
    %s72 = smul.addr 4, 6
    %s73 = scalar_lea.vmem [#allocation0], %s72
    %74 = vst [vmem:[%s73] sm:%s71] %v70
    %s75 = scalar_lea.vmem [#allocation2], 56
    %v76 = vld [vmem:[%s75] sm:%s35]
    %s77 = sshllo.u32 0, 4
    %s78 = smul.addr 4, 7
    %s79 = scalar_lea.vmem [#allocation0], %s78
    %80 = vst [vmem:[%s79] sm:%s77] %v76
    %s81 = scalar_lea.vmem [#allocation2], 64
    %v82 = vld [vmem:[%s81] sm:%s35]
    %s83 = sshllo.u32 0, 4
    %s84 = smul.addr 4, 8
    %s85 = scalar_lea.vmem [#allocation0], %s84
    %86 = vst [vmem:[%s85] sm:%s83] %v82
    %s88 = ssub.s32 576, 576
    %89 = vsyncadd [#allocation1], %s88
    %s91 = sshll.u32 [#allocation0], 4
    %s92 = int_to_ptr.vmem [resolvable:$true] %s91
    %94 = dma.vmem_to_hbm [thread:$0]  %s92, 576, %s1, [#allocation1]
    %95 = dma.done [#allocation1], 576
    %96 = vsyncpa [#allocation1], 1

// kernel: spectral_norm_conv2d.1
$region0: #{spectral_norm_conv2d.1}
  #allocation0 [shape = 'u32[]', space=smem, size = 0x4, offset = 0x4, fixed_abs, tag = 'smem constant byte address 0x4 - core index']
  #allocation1 [shape = 'u32[144,128]{1,0:T(1,128)}', space=vmem, size = 0x12000, scoped, tag = 'internal scratch']
  %s0 = inlined_call_operand.vmem [shape: bf16[2,4,512], index: 0, kind: input, shape index: {}]
  %s1 = inlined_call_operand.vmem [shape: f32[8,36], index: 1, kind: input, shape index: {}]
  %s2 = inlined_call_operand.vmem [shape: f32[1,8], index: 2, kind: input, shape index: {}]
  %s3 = inlined_call_operand.vmem [shape: f32[8,1], index: 3, kind: input, shape index: {}]
  %s4 = inlined_call_operand.vmem [shape: f32[2,8,384], index: 4, kind: output, shape index: {0}]
  %s5 = inlined_call_operand.vmem [shape: f32[2,8,36], index: 5, kind: output, shape index: {1}]
  %s6 = inlined_call_operand.vmem [shape: f32[2,1,8], index: 6, kind: output, shape index: {2}]
  %7 = xla_tuple %s4, %s5, %s6
  %s8 = sld [smem:[#allocation0]]
  $region65: #{spectral_norm_conv2d.1} parent=0
    _
  %s10 = ssub.s32 1, %s8
  %s11 = scalar_select 0, %s10, %s8
  loop: start=0, step=1, limit=4
  $region2: #{spectral_norm_conv2d.1} parent=0 // loop_pre_header
    _
  $region3: #{spectral_norm_conv2d.1} parent=0 // loop_header
    %s13 = sphi 0, %s17
    %p14 = scmp.ge.s32.totalorder %s13, 4
    %s23 = sphi 0, %s25
    %s26 = sphi 0, %s23
    %s27 = sphi 0, %s26
    %s43 = sphi 0, %s27
    %s47 = sphi 0, %s47
    %s49 = sphi 0, %s47
    %s50 = sphi 0, %s49
    %s64 = sphi 0, %s50
    %s68 = sphi 0, %s68
    %s70 = sphi 0, %s68
    %s71 = sphi 0, %s70
    %s85 = sphi 0, %s71
    %s89 = sphi 0, %s89
    %s91 = sphi 0, %s89
    %s92 = sphi 0, %s91
    %s106 = sphi 0, %s92
    %s112 = sphi 0, %s114
    %s115 = sphi 0, %s112
    %s116 = sphi 0, %s115
    %s132 = sphi 0, %s116
    %s138 = sphi 0, %s140
    %s141 = sphi 0, %s138
    %s142 = sphi 0, %s141
    %s158 = sphi 0, %s142
    %s164 = sphi 0, %s166
    %s167 = sphi 0, %s164
    %s168 = sphi 0, %s167
    %s184 = sphi 0, %s168
  $region4: #{spectral_norm_conv2d.1} parent=0 // loop_header_branch
    %16 = sbr.rel (%p14) target = $region8
  $region5: #{spectral_norm_conv2d.1} parent=0 // loop_body
    %s18 = ssub.s32 %s13, 1
    %s19 = ssub.s32 %s13, 2
    %s20 = sadd.s32 %s13, 1
    %s21 = ssub.s32 %s13, %s20
    %p22 = scmp.eq.s32.totalorder %s21, 0
    %s24 = sadd.s32 %s23, 1
    %s25 = scalar_select %p22, %s23, %s24
    %p28 = pneg %p22
    %p29 = scmp.eq.s32.totalorder %s13, 1
    %p30 = por %p28, %p29
    %p31 = scmp.ne.s32.totalorder %s23, %s26
    %p32 = scmp.eq.s32.totalorder %s13, 0
    %p33 = por %p31, %p32
    %p34 = scmp.ne.s32.totalorder %s23, %s26
    %p35 = scmp.eq.s32.totalorder %s18, 1
    %p36 = por %p34, %p35
    %p37 = scmp.ne.s32.totalorder %s26, %s27
    %p38 = scmp.eq.s32.totalorder %s18, 0
    %p39 = por %p37, %p38
    %p40 = scmp.ne.s32.totalorder %s26, %s27
    %p41 = scmp.eq.s32.totalorder %s19, 1
    %p42 = por %p40, %p41
    %p44 = scmp.ne.s32.totalorder %s27, %s43
    %p45 = scmp.eq.s32.totalorder %s19, 0
    %p46 = por %p44, %p45
    %s48 = sadd.s32 %s47, 1
    %p51 = scmp.eq.s32.totalorder %s13, 1
    %p52 = scmp.ne.s32.totalorder %s47, %s49
    %p53 = scmp.eq.s32.totalorder %s13, 0
    %p54 = por %p52, %p53
    %p55 = scmp.ne.s32.totalorder %s47, %s49
    %p56 = scmp.eq.s32.totalorder %s18, 1
    %p57 = por %p55, %p56
    %p58 = scmp.ne.s32.totalorder %s49, %s50
    %p59 = scmp.eq.s32.totalorder %s18, 0
    %p60 = por %p58, %p59
    %p61 = scmp.ne.s32.totalorder %s49, %s50
    %p62 = scmp.eq.s32.totalorder %s19, 1
    %p63 = por %p61, %p62
    %p65 = scmp.ne.s32.totalorder %s50, %s64
    %p66 = scmp.eq.s32.totalorder %s19, 0
    %p67 = por %p65, %p66
    %s69 = sadd.s32 %s68, 1
    %p72 = scmp.eq.s32.totalorder %s13, 1
    %p73 = scmp.ne.s32.totalorder %s68, %s70
    %p74 = scmp.eq.s32.totalorder %s13, 0
    %p75 = por %p73, %p74
    %p76 = scmp.ne.s32.totalorder %s68, %s70
    %p77 = scmp.eq.s32.totalorder %s18, 1
    %p78 = por %p76, %p77
    %p79 = scmp.ne.s32.totalorder %s70, %s71
    %p80 = scmp.eq.s32.totalorder %s18, 0
    %p81 = por %p79, %p80
    %p82 = scmp.ne.s32.totalorder %s70, %s71
    %p83 = scmp.eq.s32.totalorder %s19, 1
    %p84 = por %p82, %p83
    %p86 = scmp.ne.s32.totalorder %s71, %s85
    %p87 = scmp.eq.s32.totalorder %s19, 0
    %p88 = por %p86, %p87
    %s90 = sadd.s32 %s89, 1
    %p93 = scmp.eq.s32.totalorder %s13, 1
    %p94 = scmp.ne.s32.totalorder %s89, %s91
    %p95 = scmp.eq.s32.totalorder %s13, 0
    %p96 = por %p94, %p95
    %p97 = scmp.ne.s32.totalorder %s89, %s91
    %p98 = scmp.eq.s32.totalorder %s18, 1
    %p99 = por %p97, %p98
    %p100 = scmp.ne.s32.totalorder %s91, %s92
    %p101 = scmp.eq.s32.totalorder %s18, 0
    %p102 = por %p100, %p101
    %p103 = scmp.ne.s32.totalorder %s91, %s92
    %p104 = scmp.eq.s32.totalorder %s19, 1
    %p105 = por %p103, %p104
    %p107 = scmp.ne.s32.totalorder %s92, %s106
    %p108 = scmp.eq.s32.totalorder %s19, 0
    %p109 = por %p107, %p108
    %s110 = ssub.s32 %s13, %s20
    %p111 = scmp.eq.s32.totalorder %s110, 0
    %s113 = sadd.s32 %s112, 1
    %s114 = scalar_select %p111, %s112, %s113
    %p117 = pneg %p111
    %p118 = scmp.eq.s32.totalorder %s13, 1
    %p119 = por %p117, %p118
    %p120 = scmp.ne.s32.totalorder %s112, %s115
    %p121 = scmp.eq.s32.totalorder %s13, 0
    %p122 = por %p120, %p121
    %p123 = scmp.ne.s32.totalorder %s112, %s115
    %p124 = scmp.eq.s32.totalorder %s18, 1
    %p125 = por %p123, %p124
    %p126 = scmp.ne.s32.totalorder %s115, %s116
    %p127 = scmp.eq.s32.totalorder %s18, 0
    %p128 = por %p126, %p127
    %p129 = scmp.ne.s32.totalorder %s115, %s116
    %p130 = scmp.eq.s32.totalorder %s19, 1
    %p131 = por %p129, %p130
    %p133 = scmp.ne.s32.totalorder %s116, %s132
    %p134 = scmp.eq.s32.totalorder %s19, 0
    %p135 = por %p133, %p134
    %s136 = ssub.s32 %s13, %s20
    %p137 = scmp.eq.s32.totalorder %s136, 0
    %s139 = sadd.s32 %s138, 1
    %s140 = scalar_select %p137, %s138, %s139
    %p143 = pneg %p137
    %p144 = scmp.eq.s32.totalorder %s13, 1
    %p145 = por %p143, %p144
    %p146 = scmp.ne.s32.totalorder %s138, %s141
    %p147 = scmp.eq.s32.totalorder %s13, 0
    %p148 = por %p146, %p147
    %p149 = scmp.ne.s32.totalorder %s138, %s141
    %p150 = scmp.eq.s32.totalorder %s18, 1
    %p151 = por %p149, %p150
    %p152 = scmp.ne.s32.totalorder %s141, %s142
    %p153 = scmp.eq.s32.totalorder %s18, 0
    %p154 = por %p152, %p153
    %p155 = scmp.ne.s32.totalorder %s141, %s142
    %p156 = scmp.eq.s32.totalorder %s19, 1
    %p157 = por %p155, %p156
    %p159 = scmp.ne.s32.totalorder %s142, %s158
    %p160 = scmp.eq.s32.totalorder %s19, 0
    %p161 = por %p159, %p160
    %s162 = ssub.s32 %s13, %s20
    %p163 = scmp.eq.s32.totalorder %s162, 0
    %s165 = sadd.s32 %s164, 1
    %s166 = scalar_select %p163, %s164, %s165
    %p169 = pneg %p163
    %p170 = scmp.eq.s32.totalorder %s13, 1
    %p171 = por %p169, %p170
    %p172 = scmp.ne.s32.totalorder %s164, %s167
    %p173 = scmp.eq.s32.totalorder %s13, 0
    %p174 = por %p172, %p173
    %p175 = scmp.ne.s32.totalorder %s164, %s167
    %p176 = scmp.eq.s32.totalorder %s18, 1
    %p177 = por %p175, %p176
    %p178 = scmp.ne.s32.totalorder %s167, %s168
    %p179 = scmp.eq.s32.totalorder %s18, 0
    %p180 = por %p178, %p179
    %p181 = scmp.ne.s32.totalorder %s167, %s168
    %p182 = scmp.eq.s32.totalorder %s19, 1
    %p183 = por %p181, %p182
    %p185 = scmp.ne.s32.totalorder %s168, %s184
    %p186 = scmp.eq.s32.totalorder %s19, 0
    %p187 = por %p185, %p186
    %p188 = scmp.le.s32.totalorder 1, %s13
    %p189 = scmp.lt.s32.totalorder %s13, 3
    %p190 = pnand %p188, %p189
    %p191 = pneg %p190
    // Predicated region
    $region9: #{spectral_norm_conv2d.1} parent=5 // pred_check
      _
    $region10: #{spectral_norm_conv2d.1} parent=5 // pred_check_branch
      %193 = sbr.rel (%p190) target = $region12
    $region11: #{spectral_norm_conv2d.1} parent=5 // pred_region
      %s194 = ssub.s32 %s13, 1
      // Predicated region
      $region13: #{spectral_norm_conv2d.1} parent=11 // pred_check
        %p195 = pneg %p60
      $region14: #{spectral_norm_conv2d.1} parent=11 // pred_check_branch
        %197 = sbr.rel (%p195) target = $region16
      $region15: #{spectral_norm_conv2d.1} parent=11 // pred_region
        _
      $region16: #{spectral_norm_conv2d.1} parent=11 // pred_fallthru
        _
      // Predicated region
      $region17: #{spectral_norm_conv2d.1} parent=11 // pred_check
        %p198 = pneg %p81
      $region18: #{spectral_norm_conv2d.1} parent=11 // pred_check_branch
        %200 = sbr.rel (%p198) target = $region20
      $region19: #{spectral_norm_conv2d.1} parent=11 // pred_region
        _
      $region20: #{spectral_norm_conv2d.1} parent=11 // pred_fallthru
        _
      // Predicated region
      $region21: #{spectral_norm_conv2d.1} parent=11 // pred_check
        %p201 = pneg %p102
      $region22: #{spectral_norm_conv2d.1} parent=11 // pred_check_branch
        %203 = sbr.rel (%p201) target = $region24
      $region23: #{spectral_norm_conv2d.1} parent=11 // pred_region
        _
      $region24: #{spectral_norm_conv2d.1} parent=11 // pred_fallthru
        _
    $region12: #{spectral_norm_conv2d.1} parent=5 // pred_fallthru
      _
    %p204 = scmp.lt.s32.totalorder %s13, 2
    // Predicated region
    $region25: #{spectral_norm_conv2d.1} parent=5 // pred_check
      %p205 = pneg %p204
    $region26: #{spectral_norm_conv2d.1} parent=5 // pred_check_branch
      %207 = sbr.rel (%p205) target = $region28
    $region27: #{spectral_norm_conv2d.1} parent=5 // pred_region
      // Predicated region
      $region29: #{spectral_norm_conv2d.1} parent=27 // pred_check
        %p208 = pneg %p33
      $region30: #{spectral_norm_conv2d.1} parent=27 // pred_check_branch
        %210 = sbr.rel (%p208) target = $region32
      $region31: #{spectral_norm_conv2d.1} parent=27 // pred_region
        %p211 = scmp.lt.s32.totalorder %s13, 1
        %s212 = scalar_select %p211, %s13, 1
        %s213 = smul.addr %s212, 4
        %s214 = smul.addr %s213, 2
        %s215 = scalar_lea.vmem %s0, %s214
      $region32: #{spectral_norm_conv2d.1} parent=27 // pred_fallthru
        _
    $region28: #{spectral_norm_conv2d.1} parent=5 // pred_fallthru
      _
    %p216 = scmp.le.s32.totalorder 1, %s13
    %p217 = scmp.lt.s32.totalorder %s13, 3
    %p218 = pnand %p216, %p217
    %p219 = pneg %p218
    // Predicated region
    $region33: #{spectral_norm_conv2d.1} parent=5 // pred_check
      _
    $region34: #{spectral_norm_conv2d.1} parent=5 // pred_check_branch
      %221 = sbr.rel (%p218) target = $region36
    $region35: #{spectral_norm_conv2d.1} parent=5 // pred_region
      %s222 = ssub.s32 %s13, 1
      %p223 = scmp.lt.s32.totalorder %s18, 1
      %s224 = scalar_select %p223, %s18, 1
      %s225 = smul.addr %s224, 4
      %s226 = smul.addr %s225, 2
      %s227 = scalar_lea.vmem %s0, %s226
      %p228 = pneg %p39
      %p229 = pneg %p36
      %p230 = pneg %p60
      %p231 = pneg %p57
      %p232 = pneg %p81
      %p233 = pneg %p78
      %p234 = pneg %p102
      %p235 = pneg %p99
      %p236 = pneg %p128
      %p237 = pneg %p125
      %p238 = scmp.lt.s32.totalorder %s18, 1
      %s239 = scalar_select %p238, %s18, 1
      %s240 = smul.addr %s239, 3
      %s241 = smul.addr %s240, 8
      %s242 = scalar_lea.vmem %s4, %s241
      %p243 = pneg %p154
      %p244 = pneg %p151
      %p245 = scmp.lt.s32.totalorder %s18, 1
      %s246 = scalar_select %p245, %s18, 1
      %s247 = smul.addr %s246, 8
      %s248 = scalar_lea.vmem %s5, %s247
      %p249 = pneg %p180
      %p250 = pneg %p177
      %p251 = scmp.lt.s32.totalorder %s18, 1
      %s252 = scalar_select %p251, %s18, 1
      %s253 = scalar_lea.vmem %s6, %s252
      %p254 = scmp.lt.s32.totalorder %s18, 1
      %s255 = scalar_select %p254, %s18, 1
      %s256 = smul.addr %s255, 4
      %s257 = smul.addr %s256, 2
      %s258 = scalar_lea.vmem %s0, %s257
      %p259 = scmp.lt.s32.totalorder %s18, 1
      %s260 = scalar_select %p259, %s18, 1
      %s261 = smul.addr %s260, 3
      %s262 = smul.addr %s261, 8
      %s263 = scalar_lea.vmem %s4, %s262
      %p264 = scmp.lt.s32.totalorder %s18, 1
      %s265 = scalar_select %p264, %s18, 1
      %s266 = smul.addr %s265, 8
      %s267 = scalar_lea.vmem %s5, %s266
      %p268 = scmp.lt.s32.totalorder %s18, 1
      %s269 = scalar_select %p268, %s18, 1
      %s270 = scalar_lea.vmem %s6, %s269
      %v272 = vld [vmem:[%s1] sm:$0xff]
      %v273 = vld [vmem:[%s2] sm:$0x1]
      %vm274 = vcmask 64512
      %v276 = vsel %vm274, %v273, 0
      %278 = vmatprep.subr.mxu0 0.0
      %279 = vmatpush1.msra.mxu0 %v272
      %280 = vmatprep.subr.mxu0 0.0
      %281 = vmatpush1.msra.mxu0 0.0
      %282 = vmatprep.subr.mxu0 0.0
      %283 = vmatpush1.msra.mxu0 0.0
      %284 = vmatprep.subr.mxu0 0.0
      %285 = vmatpush1.msra.mxu0 0.0
      %286 = vmatprep.subr.mxu0 0.0
      %287 = vmatpush1.msra.mxu0 0.0
      %288 = vmatprep.subr.mxu0 0.0
      %289 = vmatpush1.msra.mxu0 0.0
      %290 = vmatprep.subr.mxu0 0.0
      %291 = vmatpush1.msra.mxu0 0.0
      %292 = vmatprep.subr.mxu0 0.0
      %293 = vmatpush1.msra.mxu0 0.0
      %294 = vmatprep.subr.mxu0 0.0
      %295 = vmatpush1.msra.mxu0 0.0
      %296 = vmatprep.subr.mxu0 0.0
      %297 = vmatpush1.msra.mxu0 0.0
      %298 = vmatprep.subr.mxu0 0.0
      %299 = vmatpush1.msra.mxu0 0.0
      %300 = vmatprep.subr.mxu0 0.0
      %301 = vmatpush1.msra.mxu0 0.0
      %302 = vmatprep.subr.mxu0 0.0
      %303 = vmatpush1.msra.mxu0 0.0
      %304 = vmatprep.subr.mxu0 0.0
      %305 = vmatpush1.msra.mxu0 0.0
      %306 = vmatprep.subr.mxu0 0.0
      %307 = vmatpush1.msra.mxu0 0.0
      %308 = vmatprep.subr.mxu0 0.0
      %309 = vmatpush1.msra.mxu0 0.0
      %310 = vmatprep.subr.mxu0 0.0
      %311 = vmatpush1.msra.mxu0 0.0
      %312 = vmatprep.subr.mxu0 0.0
      %313 = vmatpush1.msra.mxu0 0.0
      %314 = vmatprep.subr.mxu0 0.0
      %315 = vmatpush1.msra.mxu0 0.0
      %316 = vmatprep.subr.mxu0 0.0
      %317 = vmatpush1.msra.mxu0 0.0
      %318 = vmatprep.subr.mxu0 0.0
      %319 = vmatpush1.msra.mxu0 0.0
      %320 = vmatprep.subr.mxu0 0.0
      %321 = vmatpush1.msra.mxu0 0.0
      %322 = vmatprep.subr.mxu0 0.0
      %323 = vmatpush1.msra.mxu0 0.0
      %324 = vmatprep.subr.mxu0 0.0
      %325 = vmatpush1.msra.mxu0 0.0
      %326 = vmatprep.subr.mxu0 0.0
      %327 = vmatpush1.msra.mxu0 0.0
      %328 = vmatprep.subr.mxu0 0.0
      %329 = vmatpush1.msra.mxu0 0.0
      %330 = vmatprep.subr.mxu0 0.0
      %331 = vmatpush1.msra.mxu0 0.0
      %332 = vmatprep.subr.mxu0 0.0
      %333 = vmatpush1.msra.mxu0 0.0
      %334 = vmatprep.subr.mxu0 0.0
      %335 = vmatpush1.msra.mxu0 0.0
      %336 = vmatprep.subr.mxu0 0.0
      %337 = vmatpush1.msra.mxu0 0.0
      %338 = vmatprep.subr.mxu0 0.0
      %339 = vmatpush1.msra.mxu0 0.0
      %340 = vmatprep.subr.mxu0 0.0
      %341 = vmatpush1.msra.mxu0 0.0
      %342 = vmatprep.mubr.f32.mxu0 0.0
      %343 = vmatmul.mubr.f32.gmra.mrb[0].mxu0 %v276
      %v344 = vpop.f32.mrb[0].mxu0
      %v345 = vadd.f32 0.0, %v344
      %v346 = vpop.f32.mrb[0].mxu0
      %347 = vdwg.mxu0
      %v348 = vmul.f32 %v345, %v345
      %vm349 = vcmask 286720
      %v350 = vsel %vm349, %v348, 0.0
      %351 = vadd.xlane.f32.xlu0 %v350
      %v352 = vpop.xlane.xlu0 %351
      %v353 = vrot.slane %v352, 4
      %v354 = vadd.f32 %v352, %v353
      %v355 = vrot.slane %v354, 2
      %v356 = vadd.f32 %v354, %v355
      %v357 = vrot.slane %v356, 1
      %v358 = vadd.f32 %v356, %v357
      %s359 = vtos %v358
      %v360 = vstv %s359
      %v361 = vrsqrt.pop %v360
      %v362 = vmul.f32 %v360, %v361
      %vm363 = vcmp.eq.f32.partialorder %v360, inf
      %v364 = vsel %vm363, %v360, %v362
      %vm365 = vcmp.eq.f32.partialorder %v360, 0.0
      %v366 = vand.u32 %v360, 2147483648
      %v367 = vsel %vm365, %v366, %v364
      %s368 = vtos %v367
      %s369 = sadd.f32 %s368, 1e-12
      %v370 = vstv %s369
      %v371 = vrcp.pop %v370
      %s372 = vtos %v371
      %v373 = vstv %s372
      %v374 = vmul.f32 %v345, %v373
      %vm375 = vcmask 293888
      %v377 = vsel %vm375, %v374, 0
      %v380 = vsel %vm375, %v272, 0
      %382 = vmatprep.subr.mxu0 0.0
      %383 = vmatpush1.xpose.msra.mxu0 %v380
      %384 = vmatprep.subr.mxu0 0.0
      %385 = vmatpush1.xpose.msra.mxu0 0.0
      %386 = vmatprep.subr.mxu0 0.0
      %387 = vmatpush1.xpose.msra.mxu0 0.0
      %388 = vmatprep.subr.mxu0 0.0
      %389 = vmatpush1.xpose.msra.mxu0 0.0
      %390 = vmatprep.subr.mxu0 0.0
      %391 = vmatpush1.xpose.msra.mxu0 0.0
      %392 = vmatprep.subr.mxu0 0.0
      %393 = vmatpush1.xpose.msra.mxu0 0.0
      %394 = vmatprep.subr.mxu0 0.0
      %395 = vmatpush1.xpose.msra.mxu0 0.0
      %396 = vmatprep.subr.mxu0 0.0
      %397 = vmatpush1.xpose.msra.mxu0 0.0
      %398 = vmatprep.subr.mxu0 0.0
      %399 = vmatpush1.xpose.msra.mxu0 0.0
      %400 = vmatprep.subr.mxu0 0.0
      %401 = vmatpush1.xpose.msra.mxu0 0.0
      %402 = vmatprep.subr.mxu0 0.0
      %403 = vmatpush1.xpose.msra.mxu0 0.0
      %404 = vmatprep.subr.mxu0 0.0
      %405 = vmatpush1.xpose.msra.mxu0 0.0
      %406 = vmatprep.subr.mxu0 0.0
      %407 = vmatpush1.xpose.msra.mxu0 0.0
      %408 = vmatprep.subr.mxu0 0.0
      %409 = vmatpush1.xpose.msra.mxu0 0.0
      %410 = vmatprep.subr.mxu0 0.0
      %411 = vmatpush1.xpose.msra.mxu0 0.0
      %412 = vmatprep.subr.mxu0 0.0
      %413 = vmatpush1.xpose.msra.mxu0 0.0
      %414 = vmatprep.subr.mxu0 0.0
      %415 = vmatpush1.xpose.msra.mxu0 0.0
      %416 = vmatprep.subr.mxu0 0.0
      %417 = vmatpush1.xpose.msra.mxu0 0.0
      %418 = vmatprep.subr.mxu0 0.0
      %419 = vmatpush1.xpose.msra.mxu0 0.0
      %420 = vmatprep.subr.mxu0 0.0
      %421 = vmatpush1.xpose.msra.mxu0 0.0
      %422 = vmatprep.subr.mxu0 0.0
      %423 = vmatpush1.xpose.msra.mxu0 0.0
      %424 = vmatprep.subr.mxu0 0.0
      %425 = vmatpush1.xpose.msra.mxu0 0.0
      %426 = vmatprep.subr.mxu0 0.0
      %427 = vmatpush1.xpose.msra.mxu0 0.0
      %428 = vmatprep.subr.mxu0 0.0
      %429 = vmatpush1.xpose.msra.mxu0 0.0
      %430 = vmatprep.subr.mxu0 0.0
      %431 = vmatpush1.xpose.msra.mxu0 0.0
      %432 = vmatprep.subr.mxu0 0.0
      %433 = vmatpush1.xpose.msra.mxu0 0.0
      %434 = vmatprep.subr.mxu0 0.0
      %435 = vmatpush1.xpose.msra.mxu0 0.0
      %436 = vmatprep.subr.mxu0 0.0
      %437 = vmatpush1.xpose.msra.mxu0 0.0
      %438 = vmatprep.subr.mxu0 0.0
      %439 = vmatpush1.xpose.msra.mxu0 0.0
      %440 = vmatprep.subr.mxu0 0.0
      %441 = vmatpush1.xpose.msra.mxu0 0.0
      %442 = vmatprep.subr.mxu0 0.0
      %443 = vmatpush1.xpose.msra.mxu0 0.0
      %444 = vmatprep.subr.mxu0 0.0
      %445 = vmatpush1.xpose.msra.mxu0 0.0
      %446 = vmatprep.mubr.f32.mxu0 0.0
      %447 = vmatmul.mubr.f32.gmra.mrb[0].mxu0 %v377
      %v448 = vpop.f32.mrb[0].mxu0
      %v449 = vadd.f32 0.0, %v448
      %v450 = vpop.f32.mrb[0].mxu0
      %451 = vdwg.mxu0
      %v452 = vmul.f32 %v449, %v449
      %vm453 = vcmask 57344
      %v454 = vsel %vm453, %v452, 0.0
      %455 = vadd.xlane.f32.xlu0 %v454
      %v456 = vpop.xlane.xlu0 %455
      %v457 = vrot.slane %v456, 4
      %v458 = vadd.f32 %v456, %v457
      %v459 = vrot.slane %v458, 2
      %v460 = vadd.f32 %v458, %v459
      %v461 = vrot.slane %v460, 1
      %v462 = vadd.f32 %v460, %v461
      %s463 = vtos %v462
      %v464 = vstv %s463
      %v465 = vrsqrt.pop %v464
      %v466 = vmul.f32 %v464, %v465
      %vm467 = vcmp.eq.f32.partialorder %v464, inf
      %v468 = vsel %vm467, %v464, %v466
      %vm469 = vcmp.eq.f32.partialorder %v464, 0.0
      %v470 = vand.u32 %v464, 2147483648
      %v471 = vsel %vm469, %v470, %v468
      %s472 = vtos %v471
      %s473 = sadd.f32 %s472, 1e-12
      %v474 = vstv %s473
      %v475 = vrcp.pop %v474
      %s476 = vtos %v475
      %v477 = vstv %s476
      %v478 = vmul.f32 %v449, %v477
      %v479 = vmul.f32 %v478, %v449
      %v480 = vsel %vm453, %v479, 0.0
      %481 = vadd.xlane.f32.xlu0 %v480
      %v482 = vpop.xlane.xlu0 %481
      %v483 = vrot.slane %v482, 4
      %v484 = vadd.f32 %v482, %v483
      %v485 = vrot.slane %v484, 2
      %v486 = vadd.f32 %v484, %v485
      %v487 = vrot.slane %v486, 1
      %v488 = vadd.f32 %v486, %v487
      %s489 = vtos %v488
      %v490 = vstv %s489
      %v491 = vrcp.pop %v490
      %s492 = vtos %v491
      %v493 = vstv %s492
      %v494 = vmul.f32 %v272, %v493
      %495 = vst.msk [vmem:[%s267] sm:$0xff] %vm375, %v494
      %496 = vst.msk [vmem:[%s270] sm:$0x1] %vm453, %v478
      %v497 = vpack.c.bf16 %v494, %v494
      %v498 = vld [vmem:[%s258] sm:$0xff]
      %500 = vrot.lane.b32.xlu0 %v497, 124
      %v501 = vpop.permute.xlu0 %500
      %v503 = vcombine.high %v498, %v498
      %v505 = vunpack.c.l.s4 1983009808
      %v506 = vunpack.c.0.s8 %v505
      %v507 = vlaneseq
      %v508 = vshrl.u32 %v507, 7
      %v509 = vsub.s32 %v506, %v508
      %v510 = vrot.slane %v498, %v509
      %v512 = vunpack.c.l.s4 1983009808
      %v513 = vunpack.c.0.s8 %v512
      %v514 = vlaneseq
      %v515 = vshrl.u32 %v514, 7
      %v516 = vsub.s32 %v513, %v515
      %v517 = vrot.slane %v503, %v516
      %v518 = vcombine.high %v510, %v510
      %v519 = vcombine.high %v517, %v517
      %520 = vrot.lane.b32.xlu0 %v510, 127
      %v521 = vpop.permute.xlu0 %520
      %522 = vrot.lane.b32.xlu0 %v518, 127
      %v523 = vpop.permute.xlu0 %522
      %524 = vrot.lane.b32.xlu0 %v517, 127
      %v525 = vpop.permute.xlu0 %524
      %526 = vrot.lane.b32.xlu0 %v519, 127
      %v527 = vpop.permute.xlu0 %526
      %vm528 = vcmask 1039360
      %v529 = vsel %vm528, %v521, %v523
      %v530 = vsel %vm528, %v523, %v525
      %v531 = vsel %vm528, %v525, %v527
      %vm532 = vcmask 31744
      %v534 = vsel %vm532, %v501, 0
      %vm536 = vcmask 1041408
      %v538 = vsel %vm536, %v529, 0
      %v541 = vsel %vm536, %v530, 0
      %v544 = vsel %vm536, %v531, 0
      %546 = vmatprep.subr.bf16.mxu0 %v541
      %547 = vmatpush1.bf16.msra.mxu0 %v538
      %548 = vmatprep.subr.bf16.mxu0 0
      %549 = vmatpush1.bf16.msra.mxu0 0
      %550 = vmatprep.subr.bf16.mxu0 0
      %551 = vmatpush1.bf16.msra.mxu0 0
      %552 = vmatprep.subr.bf16.mxu0 0
      %553 = vmatpush1.bf16.msra.mxu0 0
      %554 = vmatprep.subr.bf16.mxu0 0
      %555 = vmatpush1.bf16.msra.mxu0 0
      %556 = vmatprep.subr.bf16.mxu0 0
      %557 = vmatpush1.bf16.msra.mxu0 0
      %558 = vmatprep.subr.bf16.mxu0 0
      %559 = vmatpush1.bf16.msra.mxu0 0
      %560 = vmatprep.subr.bf16.mxu0 0
      %561 = vmatpush1.bf16.msra.mxu0 0
      %562 = vmatprep.subr.bf16.mxu0 0
      %563 = vmatpush1.bf16.msra.mxu0 0
      %564 = vmatprep.subr.bf16.mxu0 0
      %565 = vmatpush1.bf16.msra.mxu0 0
      %566 = vmatprep.subr.bf16.mxu0 0
      %567 = vmatpush1.bf16.msra.mxu0 0
      %568 = vmatprep.subr.bf16.mxu0 0
      %569 = vmatpush1.bf16.msra.mxu0 0
      %570 = vmatprep.subr.bf16.mxu0 0
      %571 = vmatpush1.bf16.msra.mxu0 0
      %572 = vmatprep.subr.bf16.mxu0 0
      %573 = vmatpush1.bf16.msra.mxu0 0
      %574 = vmatprep.subr.bf16.mxu0 0
      %575 = vmatpush1.bf16.msra.mxu0 0
      %576 = vmatprep.subr.bf16.mxu0 0
      %577 = vmatpush1.bf16.msra.mxu0 0
      %578 = vmatprep.mubr.bf16.mxu0 0
      %579 = vmatmul.mubr.bf16.gmra.mrb[0].mxu0 %v534
      %v580 = vpop.f32.mrb[0].mxu0
      %v581 = vadd.f32 0.0, %v580
      %v582 = vpop.f32.mrb[0].mxu0
      %v583 = vadd.f32 0.0, %v582
      %v584 = vpop.f32.mrb[0].mxu0
      %v585 = vpop.f32.mrb[0].mxu0
      %586 = vdwg.mxu0
      %587 = vmatprep.subr.bf16.mxu0 0
      %588 = vmatpush1.bf16.msra.mxu0 %v544
      %589 = vmatprep.subr.bf16.mxu0 0
      %590 = vmatpush1.bf16.msra.mxu0 0
      %591 = vmatprep.subr.bf16.mxu0 0
      %592 = vmatpush1.bf16.msra.mxu0 0
      %593 = vmatprep.subr.bf16.mxu0 0
      %594 = vmatpush1.bf16.msra.mxu0 0
      %595 = vmatprep.subr.bf16.mxu0 0
      %596 = vmatpush1.bf16.msra.mxu0 0
      %597 = vmatprep.subr.bf16.mxu0 0
      %598 = vmatpush1.bf16.msra.mxu0 0
      %599 = vmatprep.subr.bf16.mxu0 0
      %600 = vmatpush1.bf16.msra.mxu0 0
      %601 = vmatprep.subr.bf16.mxu0 0
      %602 = vmatpush1.bf16.msra.mxu0 0
      %603 = vmatprep.subr.bf16.mxu0 0
      %604 = vmatpush1.bf16.msra.mxu0 0
      %605 = vmatprep.subr.bf16.mxu0 0
      %606 = vmatpush1.bf16.msra.mxu0 0
      %607 = vmatprep.subr.bf16.mxu0 0
      %608 = vmatpush1.bf16.msra.mxu0 0
      %609 = vmatprep.subr.bf16.mxu0 0
      %610 = vmatpush1.bf16.msra.mxu0 0
      %611 = vmatprep.subr.bf16.mxu0 0
      %612 = vmatpush1.bf16.msra.mxu0 0
      %613 = vmatprep.subr.bf16.mxu0 0
      %614 = vmatpush1.bf16.msra.mxu0 0
      %615 = vmatprep.subr.bf16.mxu0 0
      %616 = vmatpush1.bf16.msra.mxu0 0
      %617 = vmatprep.subr.bf16.mxu0 0
      %618 = vmatpush1.bf16.msra.mxu0 0
      %619 = vmatprep.mubr.bf16.mxu0 0
      %620 = vmatmul.mubr.bf16.gmra.mrb[0].mxu0 %v534
      %v621 = vpop.f32.mrb[0].mxu0
      %v622 = vadd.f32 0.0, %v621
      %v623 = vpop.f32.mrb[0].mxu0
      %v624 = vpop.f32.mrb[0].mxu0
      %v625 = vpop.f32.mrb[0].mxu0
      %626 = vdwg.mxu0
      %v628 = vsel %vm532, %v497, 0
      %v631 = vsel %vm536, %v510, 0
      %v634 = vsel %vm536, %v518, 0
      %v637 = vsel %vm536, %v517, 0
      %639 = vmatprep.subr.bf16.mxu0 %v634
      %640 = vmatpush1.bf16.msra.mxu0 %v631
      %641 = vmatprep.subr.bf16.mxu0 0
      %642 = vmatpush1.bf16.msra.mxu0 0
      %643 = vmatprep.subr.bf16.mxu0 0
      %644 = vmatpush1.bf16.msra.mxu0 0
      %645 = vmatprep.subr.bf16.mxu0 0
      %646 = vmatpush1.bf16.msra.mxu0 0
      %647 = vmatprep.subr.bf16.mxu0 0
      %648 = vmatpush1.bf16.msra.mxu0 0
      %649 = vmatprep.subr.bf16.mxu0 0
      %650 = vmatpush1.bf16.msra.mxu0 0
      %651 = vmatprep.subr.bf16.mxu0 0
      %652 = vmatpush1.bf16.msra.mxu0 0
      %653 = vmatprep.subr.bf16.mxu0 0
      %654 = vmatpush1.bf16.msra.mxu0 0
      %655 = vmatprep.subr.bf16.mxu0 0
      %656 = vmatpush1.bf16.msra.mxu0 0
      %657 = vmatprep.subr.bf16.mxu0 0
      %658 = vmatpush1.bf16.msra.mxu0 0
      %659 = vmatprep.subr.bf16.mxu0 0
      %660 = vmatpush1.bf16.msra.mxu0 0
      %661 = vmatprep.subr.bf16.mxu0 0
      %662 = vmatpush1.bf16.msra.mxu0 0
      %663 = vmatprep.subr.bf16.mxu0 0
      %664 = vmatpush1.bf16.msra.mxu0 0
      %665 = vmatprep.subr.bf16.mxu0 0
      %666 = vmatpush1.bf16.msra.mxu0 0
      %667 = vmatprep.subr.bf16.mxu0 0
      %668 = vmatpush1.bf16.msra.mxu0 0
      %669 = vmatprep.subr.bf16.mxu0 0
      %670 = vmatpush1.bf16.msra.mxu0 0
      %671 = vmatprep.mubr.bf16.mxu0 0
      %672 = vmatmul.mubr.bf16.gmra.mrb[0].mxu0 %v628
      %v673 = vpop.f32.mrb[0].mxu0
      %v674 = vadd.f32 %v581, %v673
      %v675 = vpop.f32.mrb[0].mxu0
      %v676 = vadd.f32 %v583, %v675
      %v677 = vpop.f32.mrb[0].mxu0
      %v678 = vpop.f32.mrb[0].mxu0
      %679 = vdwg.mxu0
      %680 = vmatprep.subr.bf16.mxu0 0
      %681 = vmatpush1.bf16.msra.mxu0 %v637
      %682 = vmatprep.subr.bf16.mxu0 0
      %683 = vmatpush1.bf16.msra.mxu0 0
      %684 = vmatprep.subr.bf16.mxu0 0
      %685 = vmatpush1.bf16.msra.mxu0 0
      %686 = vmatprep.subr.bf16.mxu0 0
      %687 = vmatpush1.bf16.msra.mxu0 0
      %688 = vmatprep.subr.bf16.mxu0 0
      %689 = vmatpush1.bf16.msra.mxu0 0
      %690 = vmatprep.subr.bf16.mxu0 0
      %691 = vmatpush1.bf16.msra.mxu0 0
      %692 = vmatprep.subr.bf16.mxu0 0
      %693 = vmatpush1.bf16.msra.mxu0 0
      %694 = vmatprep.subr.bf16.mxu0 0
      %695 = vmatpush1.bf16.msra.mxu0 0
      %696 = vmatprep.subr.bf16.mxu0 0
      %697 = vmatpush1.bf16.msra.mxu0 0
      %698 = vmatprep.subr.bf16.mxu0 0
      %699 = vmatpush1.bf16.msra.mxu0 0
      %700 = vmatprep.subr.bf16.mxu0 0
      %701 = vmatpush1.bf16.msra.mxu0 0
      %702 = vmatprep.subr.bf16.mxu0 0
      %703 = vmatpush1.bf16.msra.mxu0 0
      %704 = vmatprep.subr.bf16.mxu0 0
      %705 = vmatpush1.bf16.msra.mxu0 0
      %706 = vmatprep.subr.bf16.mxu0 0
      %707 = vmatpush1.bf16.msra.mxu0 0
      %708 = vmatprep.subr.bf16.mxu0 0
      %709 = vmatpush1.bf16.msra.mxu0 0
      %710 = vmatprep.subr.bf16.mxu0 0
      %711 = vmatpush1.bf16.msra.mxu0 0
      %712 = vmatprep.mubr.bf16.mxu0 0
      %713 = vmatmul.mubr.bf16.gmra.mrb[0].mxu0 %v628
      %v714 = vpop.f32.mrb[0].mxu0
      %v715 = vadd.f32 %v622, %v714
      %v716 = vpop.f32.mrb[0].mxu0
      %v717 = vpop.f32.mrb[0].mxu0
      %v718 = vpop.f32.mrb[0].mxu0
      %719 = vdwg.mxu0
      %720 = vrot.lane.b32.xlu0 %v497, 120
      %v721 = vpop.permute.xlu0 %720
      %722 = vrot.lane.b32.xlu0 %v510, 126
      %v723 = vpop.permute.xlu0 %722
      %724 = vrot.lane.b32.xlu0 %v518, 126
      %v725 = vpop.permute.xlu0 %724
      %726 = vrot.lane.b32.xlu0 %v517, 126
      %v727 = vpop.permute.xlu0 %726
      %728 = vrot.lane.b32.xlu0 %v519, 126
      %v729 = vpop.permute.xlu0 %728
      %vm730 = vcmask 1031168
      %v731 = vsel %vm730, %v723, %v725
      %v732 = vsel %vm730, %v725, %v727
      %v733 = vsel %vm730, %v727, %v729
      %v735 = vsel %vm532, %v721, 0
      %v738 = vsel %vm536, %v731, 0
      %v741 = vsel %vm536, %v732, 0
      %v744 = vsel %vm536, %v733, 0
      %746 = vmatprep.subr.bf16.mxu0 %v741
      %747 = vmatpush1.bf16.msra.mxu0 %v738
      %748 = vmatprep.subr.bf16.mxu0 0
      %749 = vmatpush1.bf16.msra.mxu0 0
      %750 = vmatprep.subr.bf16.mxu0 0
      %751 = vmatpush1.bf16.msra.mxu0 0
      %752 = vmatprep.subr.bf16.mxu0 0
      %753 = vmatpush1.bf16.msra.mxu0 0
      %754 = vmatprep.subr.bf16.mxu0 0
      %755 = vmatpush1.bf16.msra.mxu0 0
      %756 = vmatprep.subr.bf16.mxu0 0
      %757 = vmatpush1.bf16.msra.mxu0 0
      %758 = vmatprep.subr.bf16.mxu0 0
      %759 = vmatpush1.bf16.msra.mxu0 0
      %760 = vmatprep.subr.bf16.mxu0 0
      %761 = vmatpush1.bf16.msra.mxu0 0
      %762 = vmatprep.subr.bf16.mxu0 0
      %763 = vmatpush1.bf16.msra.mxu0 0
      %764 = vmatprep.subr.bf16.mxu0 0
      %765 = vmatpush1.bf16.msra.mxu0 0
      %766 = vmatprep.subr.bf16.mxu0 0
      %767 = vmatpush1.bf16.msra.mxu0 0
      %768 = vmatprep.subr.bf16.mxu0 0
      %769 = vmatpush1.bf16.msra.mxu0 0
      %770 = vmatprep.subr.bf16.mxu0 0
      %771 = vmatpush1.bf16.msra.mxu0 0
      %772 = vmatprep.subr.bf16.mxu0 0
      %773 = vmatpush1.bf16.msra.mxu0 0
      %774 = vmatprep.subr.bf16.mxu0 0
      %775 = vmatpush1.bf16.msra.mxu0 0
      %776 = vmatprep.subr.bf16.mxu0 0
      %777 = vmatpush1.bf16.msra.mxu0 0
      %778 = vmatprep.mubr.bf16.mxu0 0
      %779 = vmatmul.mubr.bf16.gmra.mrb[0].mxu0 %v735
      %v780 = vpop.f32.mrb[0].mxu0
      %v781 = vadd.f32 0.0, %v780
      %v782 = vpop.f32.mrb[0].mxu0
      %v783 = vadd.f32 0.0, %v782
      %v784 = vpop.f32.mrb[0].mxu0
      %v785 = vpop.f32.mrb[0].mxu0
      %786 = vdwg.mxu0
      %787 = vmatprep.subr.bf16.mxu0 0
      %788 = vmatpush1.bf16.msra.mxu0 %v744
      %789 = vmatprep.subr.bf16.mxu0 0
      %790 = vmatpush1.bf16.msra.mxu0 0
      %791 = vmatprep.subr.bf16.mxu0 0
      %792 = vmatpush1.bf16.msra.mxu0 0
      %793 = vmatprep.subr.bf16.mxu0 0
      %794 = vmatpush1.bf16.msra.mxu0 0
      %795 = vmatprep.subr.bf16.mxu0 0
      %796 = vmatpush1.bf16.msra.mxu0 0
      %797 = vmatprep.subr.bf16.mxu0 0
      %798 = vmatpush1.bf16.msra.mxu0 0
      %799 = vmatprep.subr.bf16.mxu0 0
      %800 = vmatpush1.bf16.msra.mxu0 0
      %801 = vmatprep.subr.bf16.mxu0 0
      %802 = vmatpush1.bf16.msra.mxu0 0
      %803 = vmatprep.subr.bf16.mxu0 0
      %804 = vmatpush1.bf16.msra.mxu0 0
      %805 = vmatprep.subr.bf16.mxu0 0
      %806 = vmatpush1.bf16.msra.mxu0 0
      %807 = vmatprep.subr.bf16.mxu0 0
      %808 = vmatpush1.bf16.msra.mxu0 0
      %809 = vmatprep.subr.bf16.mxu0 0
      %810 = vmatpush1.bf16.msra.mxu0 0
      %811 = vmatprep.subr.bf16.mxu0 0
      %812 = vmatpush1.bf16.msra.mxu0 0
      %813 = vmatprep.subr.bf16.mxu0 0
      %814 = vmatpush1.bf16.msra.mxu0 0
      %815 = vmatprep.subr.bf16.mxu0 0
      %816 = vmatpush1.bf16.msra.mxu0 0
      %817 = vmatprep.subr.bf16.mxu0 0
      %818 = vmatpush1.bf16.msra.mxu0 0
      %819 = vmatprep.mubr.bf16.mxu0 0
      %820 = vmatmul.mubr.bf16.gmra.mrb[0].mxu0 %v735
      %v821 = vpop.f32.mrb[0].mxu0
      %v822 = vadd.f32 0.0, %v821
      %v823 = vpop.f32.mrb[0].mxu0
      %v824 = vpop.f32.mrb[0].mxu0
      %v825 = vpop.f32.mrb[0].mxu0
      %826 = vdwg.mxu0
      %v827 = vadd.f32 %v674, %v781
      %v828 = vadd.f32 %v676, %v783
      %v829 = vadd.f32 %v715, %v822
      %830 = vrot.lane.b32.xlu0 %v497, 116
      %v831 = vpop.permute.xlu0 %830
      %832 = vrot.lane.b32.xlu0 %v510, 110
      %v833 = vpop.permute.xlu0 %832
      %834 = vrot.lane.b32.xlu0 %v518, 110
      %v835 = vpop.permute.xlu0 %834
      %836 = vrot.lane.b32.xlu0 %v517, 110
      %v837 = vpop.permute.xlu0 %836
      %838 = vrot.lane.b32.xlu0 %v519, 110
      %v839 = vpop.permute.xlu0 %838
      %vm840 = vcmask 900096
      %v841 = vsel %vm840, %v833, %v835
      %v842 = vsel %vm840, %v835, %v837
      %v843 = vsel %vm840, %v837, %v839
      %v845 = vsel %vm532, %v831, 0
      %v848 = vsel %vm536, %v841, 0
      %v851 = vsel %vm536, %v842, 0
      %v854 = vsel %vm536, %v843, 0
      %856 = vmatprep.subr.bf16.mxu0 %v851
      %857 = vmatpush1.bf16.msra.mxu0 %v848
      %858 = vmatprep.subr.bf16.mxu0 0
      %859 = vmatpush1.bf16.msra.mxu0 0
      %860 = vmatprep.subr.bf16.mxu0 0
      %861 = vmatpush1.bf16.msra.mxu0 0
      %862 = vmatprep.subr.bf16.mxu0 0
      %863 = vmatpush1.bf16.msra.mxu0 0
      %864 = vmatprep.subr.bf16.mxu0 0
      %865 = vmatpush1.bf16.msra.mxu0 0
      %866 = vmatprep.subr.bf16.mxu0 0
      %867 = vmatpush1.bf16.msra.mxu0 0
      %868 = vmatprep.subr.bf16.mxu0 0
      %869 = vmatpush1.bf16.msra.mxu0 0
      %870 = vmatprep.subr.bf16.mxu0 0
      %871 = vmatpush1.bf16.msra.mxu0 0
      %872 = vmatprep.subr.bf16.mxu0 0
      %873 = vmatpush1.bf16.msra.mxu0 0
      %874 = vmatprep.subr.bf16.mxu0 0
      %875 = vmatpush1.bf16.msra.mxu0 0
      %876 = vmatprep.subr.bf16.mxu0 0
      %877 = vmatpush1.bf16.msra.mxu0 0
      %878 = vmatprep.subr.bf16.mxu0 0
      %879 = vmatpush1.bf16.msra.mxu0 0
      %880 = vmatprep.subr.bf16.mxu0 0
      %881 = vmatpush1.bf16.msra.mxu0 0
      %882 = vmatprep.subr.bf16.mxu0 0
      %883 = vmatpush1.bf16.msra.mxu0 0
      %884 = vmatprep.subr.bf16.mxu0 0
      %885 = vmatpush1.bf16.msra.mxu0 0
      %886 = vmatprep.subr.bf16.mxu0 0
      %887 = vmatpush1.bf16.msra.mxu0 0
      %888 = vmatprep.mubr.bf16.mxu0 0
      %889 = vmatmul.mubr.bf16.gmra.mrb[0].mxu0 %v845
      %v890 = vpop.f32.mrb[0].mxu0
      %v891 = vadd.f32 0.0, %v890
      %v892 = vpop.f32.mrb[0].mxu0
      %v893 = vadd.f32 0.0, %v892
      %v894 = vpop.f32.mrb[0].mxu0
      %v895 = vpop.f32.mrb[0].mxu0
      %896 = vdwg.mxu0
      %897 = vmatprep.subr.bf16.mxu0 0
      %898 = vmatpush1.bf16.msra.mxu0 %v854
      %899 = vmatprep.subr.bf16.mxu0 0
      %900 = vmatpush1.bf16.msra.mxu0 0
      %901 = vmatprep.subr.bf16.mxu0 0
      %902 = vmatpush1.bf16.msra.mxu0 0
      %903 = vmatprep.subr.bf16.mxu0 0
      %904 = vmatpush1.bf16.msra.mxu0 0
      %905 = vmatprep.subr.bf16.mxu0 0
      %906 = vmatpush1.bf16.msra.mxu0 0
      %907 = vmatprep.subr.bf16.mxu0 0
      %908 = vmatpush1.bf16.msra.mxu0 0
      %909 = vmatprep.subr.bf16.mxu0 0
      %910 = vmatpush1.bf16.msra.mxu0 0
      %911 = vmatprep.subr.bf16.mxu0 0
      %912 = vmatpush1.bf16.msra.mxu0 0
      %913 = vmatprep.subr.bf16.mxu0 0
      %914 = vmatpush1.bf16.msra.mxu0 0
      %915 = vmatprep.subr.bf16.mxu0 0
      %916 = vmatpush1.bf16.msra.mxu0 0
      %917 = vmatprep.subr.bf16.mxu0 0
      %918 = vmatpush1.bf16.msra.mxu0 0
      %919 = vmatprep.subr.bf16.mxu0 0
      %920 = vmatpush1.bf16.msra.mxu0 0
      %921 = vmatprep.subr.bf16.mxu0 0
      %922 = vmatpush1.bf16.msra.mxu0 0
      %923 = vmatprep.subr.bf16.mxu0 0
      %924 = vmatpush1.bf16.msra.mxu0 0
      %925 = vmatprep.subr.bf16.mxu0 0
      %926 = vmatpush1.bf16.msra.mxu0 0
      %927 = vmatprep.subr.bf16.mxu0 0
      %928 = vmatpush1.bf16.msra.mxu0 0
      %929 = vmatprep.mubr.bf16.mxu0 0
      %930 = vmatmul.mubr.bf16.gmra.mrb[0].mxu0 %v845
      %v931 = vpop.f32.mrb[0].mxu0
      %v932 = vadd.f32 0.0, %v931
      %v933 = vpop.f32.mrb[0].mxu0
      %v934 = vpop.f32.mrb[0].mxu0
      %v935 = vpop.f32.mrb[0].mxu0
      %936 = vdwg.mxu0
      %v937 = vadd.f32 %v827, %v891
      %v938 = vadd.f32 %v828, %v893
      %v939 = vadd.f32 %v829, %v932
      %940 = vrot.lane.b32.xlu0 %v497, 112
      %v941 = vpop.permute.xlu0 %940
      %942 = vrot.lane.b32.xlu0 %v510, 109
      %v943 = vpop.permute.xlu0 %942
      %944 = vrot.lane.b32.xlu0 %v518, 109
      %v945 = vpop.permute.xlu0 %944
      %946 = vrot.lane.b32.xlu0 %v517, 109
      %v947 = vpop.permute.xlu0 %946
      %948 = vrot.lane.b32.xlu0 %v519, 109
      %v949 = vpop.permute.xlu0 %948
      %vm950 = vcmask 891904
      %v951 = vsel %vm950, %v943, %v945
      %v952 = vsel %vm950, %v945, %v947
      %v953 = vsel %vm950, %v947, %v949
      %v955 = vsel %vm532, %v941, 0
      %v958 = vsel %vm536, %v951, 0
      %v961 = vsel %vm536, %v952, 0
      %v964 = vsel %vm536, %v953, 0
      %966 = vmatprep.subr.bf16.mxu0 %v961
      %967 = vmatpush1.bf16.msra.mxu0 %v958
      %968 = vmatprep.subr.bf16.mxu0 0
      %969 = vmatpush1.bf16.msra.mxu0 0
      %970 = vmatprep.subr.bf16.mxu0 0
      %971 = vmatpush1.bf16.msra.mxu0 0
      %972 = vmatprep.subr.bf16.mxu0 0
      %973 = vmatpush1.bf16.msra.mxu0 0
      %974 = vmatprep.subr.bf16.mxu0 0
      %975 = vmatpush1.bf16.msra.mxu0 0
      %976 = vmatprep.subr.bf16.mxu0 0
      %977 = vmatpush1.bf16.msra.mxu0 0
      %978 = vmatprep.subr.bf16.mxu0 0
      %979 = vmatpush1.bf16.msra.mxu0 0
      %980 = vmatprep.subr.bf16.mxu0 0
      %981 = vmatpush1.bf16.msra.mxu0 0
      %982 = vmatprep.subr.bf16.mxu0 0
      %983 = vmatpush1.bf16.msra.mxu0 0
      %984 = vmatprep.subr.bf16.mxu0 0
      %985 = vmatpush1.bf16.msra.mxu0 0
      %986 = vmatprep.subr.bf16.mxu0 0
      %987 = vmatpush1.bf16.msra.mxu0 0
      %988 = vmatprep.subr.bf16.mxu0 0
      %989 = vmatpush1.bf16.msra.mxu0 0
      %990 = vmatprep.subr.bf16.mxu0 0
      %991 = vmatpush1.bf16.msra.mxu0 0
      %992 = vmatprep.subr.bf16.mxu0 0
      %993 = vmatpush1.bf16.msra.mxu0 0
      %994 = vmatprep.subr.bf16.mxu0 0
      %995 = vmatpush1.bf16.msra.mxu0 0
      %996 = vmatprep.subr.bf16.mxu0 0
      %997 = vmatpush1.bf16.msra.mxu0 0
      %998 = vmatprep.mubr.bf16.mxu0 0
      %999 = vmatmul.mubr.bf16.gmra.mrb[0].mxu0 %v955
      %v1000 = vpop.f32.mrb[0].mxu0
      %v1001 = vadd.f32 0.0, %v1000
      %v1002 = vpop.f32.mrb[0].mxu0
      %v1003 = vadd.f32 0.0, %v1002
      %v1004 = vpop.f32.mrb[0].mxu0
      %v1005 = vpop.f32.mrb[0].mxu0
      %1006 = vdwg.mxu0
      %1007 = vmatprep.subr.bf16.mxu0 0
      %1008 = vmatpush1.bf16.msra.mxu0 %v964
      %1009 = vmatprep.subr.bf16.mxu0 0
      %1010 = vmatpush1.bf16.msra.mxu0 0
      %1011 = vmatprep.subr.bf16.mxu0 0
      %1012 = vmatpush1.bf16.msra.mxu0 0
      %1013 = vmatprep.subr.bf16.mxu0 0
      %1014 = vmatpush1.bf16.msra.mxu0 0
      %1015 = vmatprep.subr.bf16.mxu0 0
      %1016 = vmatpush1.bf16.msra.mxu0 0
      %1017 = vmatprep.subr.bf16.mxu0 0
      %1018 = vmatpush1.bf16.msra.mxu0 0
      %1019 = vmatprep.subr.bf16.mxu0 0
      %1020 = vmatpush1.bf16.msra.mxu0 0
      %1021 = vmatprep.subr.bf16.mxu0 0
      %1022 = vmatpush1.bf16.msra.mxu0 0
      %1023 = vmatprep.subr.bf16.mxu0 0
      %1024 = vmatpush1.bf16.msra.mxu0 0
      %1025 = vmatprep.subr.bf16.mxu0 0
      %1026 = vmatpush1.bf16.msra.mxu0 0
      %1027 = vmatprep.subr.bf16.mxu0 0
      %1028 = vmatpush1.bf16.msra.mxu0 0
      %1029 = vmatprep.subr.bf16.mxu0 0
      %1030 = vmatpush1.bf16.msra.mxu0 0
      %1031 = vmatprep.subr.bf16.mxu0 0
      %1032 = vmatpush1.bf16.msra.mxu0 0
      %1033 = vmatprep.subr.bf16.mxu0 0
      %1034 = vmatpush1.bf16.msra.mxu0 0
      %1035 = vmatprep.subr.bf16.mxu0 0
      %1036 = vmatpush1.bf16.msra.mxu0 0
      %1037 = vmatprep.subr.bf16.mxu0 0
      %1038 = vmatpush1.bf16.msra.mxu0 0
      %1039 = vmatprep.mubr.bf16.mxu0 0
      %1040 = vmatmul.mubr.bf16.gmra.mrb[0].mxu0 %v955
      %v1041 = vpop.f32.mrb[0].mxu0
      %v1042 = vadd.f32 0.0, %v1041
      %v1043 = vpop.f32.mrb[0].mxu0
      %v1044 = vpop.f32.mrb[0].mxu0
      %v1045 = vpop.f32.mrb[0].mxu0
      %1046 = vdwg.mxu0
      %v1047 = vadd.f32 %v937, %v1001
      %v1048 = vadd.f32 %v938, %v1003
      %v1049 = vadd.f32 %v939, %v1042
      %1050 = vrot.lane.b32.xlu0 %v497, 108
      %v1051 = vpop.permute.xlu0 %1050
      %1052 = vrot.lane.b32.xlu0 %v510, 108
      %v1053 = vpop.permute.xlu0 %1052
      %1054 = vrot.lane.b32.xlu0 %v518, 108
      %v1055 = vpop.permute.xlu0 %1054
      %1056 = vrot.lane.b32.xlu0 %v517, 108
      %v1057 = vpop.permute.xlu0 %1056
      %1058 = vrot.lane.b32.xlu0 %v519, 108
      %v1059 = vpop.permute.xlu0 %1058
      %vm1060 = vcmask 883712
      %v1061 = vsel %vm1060, %v1053, %v1055
      %v1062 = vsel %vm1060, %v1055, %v1057
      %v1063 = vsel %vm1060, %v1057, %v1059
      %v1065 = vsel %vm532, %v1051, 0
      %v1068 = vsel %vm536, %v1061, 0
      %v1071 = vsel %vm536, %v1062, 0
      %v1074 = vsel %vm536, %v1063, 0
      %1076 = vmatprep.subr.bf16.mxu0 %v1071
      %1077 = vmatpush1.bf16.msra.mxu0 %v1068
      %1078 = vmatprep.subr.bf16.mxu0 0
      %1079 = vmatpush1.bf16.msra.mxu0 0
      %1080 = vmatprep.subr.bf16.mxu0 0
      %1081 = vmatpush1.bf16.msra.mxu0 0
      %1082 = vmatprep.subr.bf16.mxu0 0
      %1083 = vmatpush1.bf16.msra.mxu0 0
      %1084 = vmatprep.subr.bf16.mxu0 0
      %1085 = vmatpush1.bf16.msra.mxu0 0
      %1086 = vmatprep.subr.bf16.mxu0 0
      %1087 = vmatpush1.bf16.msra.mxu0 0
      %1088 = vmatprep.subr.bf16.mxu0 0
      %1089 = vmatpush1.bf16.msra.mxu0 0
      %1090 = vmatprep.subr.bf16.mxu0 0
      %1091 = vmatpush1.bf16.msra.mxu0 0
      %1092 = vmatprep.subr.bf16.mxu0 0
      %1093 = vmatpush1.bf16.msra.mxu0 0
      %1094 = vmatprep.subr.bf16.mxu0 0
      %1095 = vmatpush1.bf16.msra.mxu0 0
      %1096 = vmatprep.subr.bf16.mxu0 0
      %1097 = vmatpush1.bf16.msra.mxu0 0
      %1098 = vmatprep.subr.bf16.mxu0 0
      %1099 = vmatpush1.bf16.msra.mxu0 0
      %1100 = vmatprep.subr.bf16.mxu0 0
      %1101 = vmatpush1.bf16.msra.mxu0 0
      %1102 = vmatprep.subr.bf16.mxu0 0
      %1103 = vmatpush1.bf16.msra.mxu0 0
      %1104 = vmatprep.subr.bf16.mxu0 0
      %1105 = vmatpush1.bf16.msra.mxu0 0
      %1106 = vmatprep.subr.bf16.mxu0 0
      %1107 = vmatpush1.bf16.msra.mxu0 0
      %1108 = vmatprep.mubr.bf16.mxu0 0
      %1109 = vmatmul.mubr.bf16.gmra.mrb[0].mxu0 %v1065
      %v1110 = vpop.f32.mrb[0].mxu0
      %v1111 = vadd.f32 0.0, %v1110
      %v1112 = vpop.f32.mrb[0].mxu0
      %v1113 = vadd.f32 0.0, %v1112
      %v1114 = vpop.f32.mrb[0].mxu0
      %v1115 = vpop.f32.mrb[0].mxu0
      %1116 = vdwg.mxu0
      %1117 = vmatprep.subr.bf16.mxu0 0
      %1118 = vmatpush1.bf16.msra.mxu0 %v1074
      %1119 = vmatprep.subr.bf16.mxu0 0
      %1120 = vmatpush1.bf16.msra.mxu0 0
      %1121 = vmatprep.subr.bf16.mxu0 0
      %1122 = vmatpush1.bf16.msra.mxu0 0
      %1123 = vmatprep.subr.bf16.mxu0 0
      %1124 = vmatpush1.bf16.msra.mxu0 0
      %1125 = vmatprep.subr.bf16.mxu0 0
      %1126 = vmatpush1.bf16.msra.mxu0 0
      %1127 = vmatprep.subr.bf16.mxu0 0
      %1128 = vmatpush1.bf16.msra.mxu0 0
      %1129 = vmatprep.subr.bf16.mxu0 0
      %1130 = vmatpush1.bf16.msra.mxu0 0
      %1131 = vmatprep.subr.bf16.mxu0 0
      %1132 = vmatpush1.bf16.msra.mxu0 0
      %1133 = vmatprep.subr.bf16.mxu0 0
      %1134 = vmatpush1.bf16.msra.mxu0 0
      %1135 = vmatprep.subr.bf16.mxu0 0
      %1136 = vmatpush1.bf16.msra.mxu0 0
      %1137 = vmatprep.subr.bf16.mxu0 0
      %1138 = vmatpush1.bf16.msra.mxu0 0
      %1139 = vmatprep.subr.bf16.mxu0 0
      %1140 = vmatpush1.bf16.msra.mxu0 0
      %1141 = vmatprep.subr.bf16.mxu0 0
      %1142 = vmatpush1.bf16.msra.mxu0 0
      %1143 = vmatprep.subr.bf16.mxu0 0
      %1144 = vmatpush1.bf16.msra.mxu0 0
      %1145 = vmatprep.subr.bf16.mxu0 0
      %1146 = vmatpush1.bf16.msra.mxu0 0
      %1147 = vmatprep.subr.bf16.mxu0 0
      %1148 = vmatpush1.bf16.msra.mxu0 0
      %1149 = vmatprep.mubr.bf16.mxu0 0
      %1150 = vmatmul.mubr.bf16.gmra.mrb[0].mxu0 %v1065
      %v1151 = vpop.f32.mrb[0].mxu0
      %v1152 = vadd.f32 0.0, %v1151
      %v1153 = vpop.f32.mrb[0].mxu0
      %v1154 = vpop.f32.mrb[0].mxu0
      %v1155 = vpop.f32.mrb[0].mxu0
      %1156 = vdwg.mxu0
      %v1157 = vadd.f32 %v1047, %v1111
      %v1158 = vadd.f32 %v1048, %v1113
      %v1159 = vadd.f32 %v1049, %v1152
      %1160 = vrot.lane.b32.xlu0 %v497, 104
      %v1161 = vpop.permute.xlu0 %1160
      %1162 = vrot.lane.b32.xlu0 %v510, 92
      %v1163 = vpop.permute.xlu0 %1162
      %1164 = vrot.lane.b32.xlu0 %v518, 92
      %v1165 = vpop.permute.xlu0 %1164
      %1166 = vrot.lane.b32.xlu0 %v517, 92
      %v1167 = vpop.permute.xlu0 %1166
      %1168 = vrot.lane.b32.xlu0 %v519, 92
      %v1169 = vpop.permute.xlu0 %1168
      %vm1170 = vcmask 752640
      %v1171 = vsel %vm1170, %v1163, %v1165
      %v1172 = vsel %vm1170, %v1165, %v1167
      %v1173 = vsel %vm1170, %v1167, %v1169
      %v1175 = vsel %vm532, %v1161, 0
      %v1178 = vsel %vm536, %v1171, 0
      %v1181 = vsel %vm536, %v1172, 0
      %v1184 = vsel %vm536, %v1173, 0
      %1186 = vmatprep.subr.bf16.mxu0 %v1181
      %1187 = vmatpush1.bf16.msra.mxu0 %v1178
      %1188 = vmatprep.subr.bf16.mxu0 0
      %1189 = vmatpush1.bf16.msra.mxu0 0
      %1190 = vmatprep.subr.bf16.mxu0 0
      %1191 = vmatpush1.bf16.msra.mxu0 0
      %1192 = vmatprep.subr.bf16.mxu0 0
      %1193 = vmatpush1.bf16.msra.mxu0 0
      %1194 = vmatprep.subr.bf16.mxu0 0
      %1195 = vmatpush1.bf16.msra.mxu0 0
      %1196 = vmatprep.subr.bf16.mxu0 0
      %1197 = vmatpush1.bf16.msra.mxu0 0
      %1198 = vmatprep.subr.bf16.mxu0 0
      %1199 = vmatpush1.bf16.msra.mxu0 0
      %1200 = vmatprep.subr.bf16.mxu0 0
      %1201 = vmatpush1.bf16.msra.mxu0 0
      %1202 = vmatprep.subr.bf16.mxu0 0
      %1203 = vmatpush1.bf16.msra.mxu0 0
      %1204 = vmatprep.subr.bf16.mxu0 0
      %1205 = vmatpush1.bf16.msra.mxu0 0
      %1206 = vmatprep.subr.bf16.mxu0 0
      %1207 = vmatpush1.bf16.msra.mxu0 0
      %1208 = vmatprep.subr.bf16.mxu0 0
      %1209 = vmatpush1.bf16.msra.mxu0 0
      %1210 = vmatprep.subr.bf16.mxu0 0
      %1211 = vmatpush1.bf16.msra.mxu0 0
      %1212 = vmatprep.subr.bf16.mxu0 0
      %1213 = vmatpush1.bf16.msra.mxu0 0
      %1214 = vmatprep.subr.bf16.mxu0 0
      %1215 = vmatpush1.bf16.msra.mxu0 0
      %1216 = vmatprep.subr.bf16.mxu0 0
      %1217 = vmatpush1.bf16.msra.mxu0 0
      %1218 = vmatprep.mubr.bf16.mxu0 0
      %1219 = vmatmul.mubr.bf16.gmra.mrb[0].mxu0 %v1175
      %v1220 = vpop.f32.mrb[0].mxu0
      %v1221 = vadd.f32 0.0, %v1220
      %v1222 = vpop.f32.mrb[0].mxu0
      %v1223 = vadd.f32 0.0, %v1222
      %v1224 = vpop.f32.mrb[0].mxu0
      %v1225 = vpop.f32.mrb[0].mxu0
      %1226 = vdwg.mxu0
      %1227 = vmatprep.subr.bf16.mxu0 0
      %1228 = vmatpush1.bf16.msra.mxu0 %v1184
      %1229 = vmatprep.subr.bf16.mxu0 0
      %1230 = vmatpush1.bf16.msra.mxu0 0
      %1231 = vmatprep.subr.bf16.mxu0 0
      %1232 = vmatpush1.bf16.msra.mxu0 0
      %1233 = vmatprep.subr.bf16.mxu0 0
      %1234 = vmatpush1.bf16.msra.mxu0 0
      %1235 = vmatprep.subr.bf16.mxu0 0
      %1236 = vmatpush1.bf16.msra.mxu0 0
      %1237 = vmatprep.subr.bf16.mxu0 0
      %1238 = vmatpush1.bf16.msra.mxu0 0
      %1239 = vmatprep.subr.bf16.mxu0 0
      %1240 = vmatpush1.bf16.msra.mxu0 0
      %1241 = vmatprep.subr.bf16.mxu0 0
      %1242 = vmatpush1.bf16.msra.mxu0 0
      %1243 = vmatprep.subr.bf16.mxu0 0
      %1244 = vmatpush1.bf16.msra.mxu0 0
      %1245 = vmatprep.subr.bf16.mxu0 0
      %1246 = vmatpush1.bf16.msra.mxu0 0
      %1247 = vmatprep.subr.bf16.mxu0 0
      %1248 = vmatpush1.bf16.msra.mxu0 0
      %1249 = vmatprep.subr.bf16.mxu0 0
      %1250 = vmatpush1.bf16.msra.mxu0 0
      %1251 = vmatprep.subr.bf16.mxu0 0
      %1252 = vmatpush1.bf16.msra.mxu0 0
      %1253 = vmatprep.subr.bf16.mxu0 0
      %1254 = vmatpush1.bf16.msra.mxu0 0
      %1255 = vmatprep.subr.bf16.mxu0 0
      %1256 = vmatpush1.bf16.msra.mxu0 0
      %1257 = vmatprep.subr.bf16.mxu0 0
      %1258 = vmatpush1.bf16.msra.mxu0 0
      %1259 = vmatprep.mubr.bf16.mxu0 0
      %1260 = vmatmul.mubr.bf16.gmra.mrb[0].mxu0 %v1175
      %v1261 = vpop.f32.mrb[0].mxu0
      %v1262 = vadd.f32 0.0, %v1261
      %v1263 = vpop.f32.mrb[0].mxu0
      %v1264 = vpop.f32.mrb[0].mxu0
      %v1265 = vpop.f32.mrb[0].mxu0
      %1266 = vdwg.mxu0
      %v1267 = vadd.f32 %v1157, %v1221
      %v1268 = vadd.f32 %v1158, %v1223
      %v1269 = vadd.f32 %v1159, %v1262
      %1270 = vrot.lane.b32.xlu0 %v497, 100
      %v1271 = vpop.permute.xlu0 %1270
      %1272 = vrot.lane.b32.xlu0 %v510, 91
      %v1273 = vpop.permute.xlu0 %1272
      %1274 = vrot.lane.b32.xlu0 %v518, 91
      %v1275 = vpop.permute.xlu0 %1274
      %1276 = vrot.lane.b32.xlu0 %v517, 91
      %v1277 = vpop.permute.xlu0 %1276
      %1278 = vrot.lane.b32.xlu0 %v519, 91
      %v1279 = vpop.permute.xlu0 %1278
      %vm1280 = vcmask 744448
      %v1281 = vsel %vm1280, %v1273, %v1275
      %v1282 = vsel %vm1280, %v1275, %v1277
      %v1283 = vsel %vm1280, %v1277, %v1279
      %v1285 = vsel %vm532, %v1271, 0
      %v1288 = vsel %vm536, %v1281, 0
      %v1291 = vsel %vm536, %v1282, 0
      %v1294 = vsel %vm536, %v1283, 0
      %1296 = vmatprep.subr.bf16.mxu0 %v1291
      %1297 = vmatpush1.bf16.msra.mxu0 %v1288
      %1298 = vmatprep.subr.bf16.mxu0 0
      %1299 = vmatpush1.bf16.msra.mxu0 0
      %1300 = vmatprep.subr.bf16.mxu0 0
      %1301 = vmatpush1.bf16.msra.mxu0 0
      %1302 = vmatprep.subr.bf16.mxu0 0
      %1303 = vmatpush1.bf16.msra.mxu0 0
      %1304 = vmatprep.subr.bf16.mxu0 0
      %1305 = vmatpush1.bf16.msra.mxu0 0
      %1306 = vmatprep.subr.bf16.mxu0 0
      %1307 = vmatpush1.bf16.msra.mxu0 0
      %1308 = vmatprep.subr.bf16.mxu0 0
      %1309 = vmatpush1.bf16.msra.mxu0 0
      %1310 = vmatprep.subr.bf16.mxu0 0
      %1311 = vmatpush1.bf16.msra.mxu0 0
      %1312 = vmatprep.subr.bf16.mxu0 0
      %1313 = vmatpush1.bf16.msra.mxu0 0
      %1314 = vmatprep.subr.bf16.mxu0 0
      %1315 = vmatpush1.bf16.msra.mxu0 0
      %1316 = vmatprep.subr.bf16.mxu0 0
      %1317 = vmatpush1.bf16.msra.mxu0 0
      %1318 = vmatprep.subr.bf16.mxu0 0
      %1319 = vmatpush1.bf16.msra.mxu0 0
      %1320 = vmatprep.subr.bf16.mxu0 0
      %1321 = vmatpush1.bf16.msra.mxu0 0
      %1322 = vmatprep.subr.bf16.mxu0 0
      %1323 = vmatpush1.bf16.msra.mxu0 0
      %1324 = vmatprep.subr.bf16.mxu0 0
      %1325 = vmatpush1.bf16.msra.mxu0 0
      %1326 = vmatprep.subr.bf16.mxu0 0
      %1327 = vmatpush1.bf16.msra.mxu0 0
      %1328 = vmatprep.mubr.bf16.mxu0 0
      %1329 = vmatmul.mubr.bf16.gmra.mrb[0].mxu0 %v1285
      %v1330 = vpop.f32.mrb[0].mxu0
      %v1331 = vadd.f32 0.0, %v1330
      %v1332 = vpop.f32.mrb[0].mxu0
      %v1333 = vadd.f32 0.0, %v1332
      %v1334 = vpop.f32.mrb[0].mxu0
      %v1335 = vpop.f32.mrb[0].mxu0
      %1336 = vdwg.mxu0
      %1337 = vmatprep.subr.bf16.mxu0 0
      %1338 = vmatpush1.bf16.msra.mxu0 %v1294
      %1339 = vmatprep.subr.bf16.mxu0 0
      %1340 = vmatpush1.bf16.msra.mxu0 0
      %1341 = vmatprep.subr.bf16.mxu0 0
      %1342 = vmatpush1.bf16.msra.mxu0 0
      %1343 = vmatprep.subr.bf16.mxu0 0
      %1344 = vmatpush1.bf16.msra.mxu0 0
      %1345 = vmatprep.subr.bf16.mxu0 0
      %1346 = vmatpush1.bf16.msra.mxu0 0
      %1347 = vmatprep.subr.bf16.mxu0 0
      %1348 = vmatpush1.bf16.msra.mxu0 0
      %1349 = vmatprep.subr.bf16.mxu0 0
      %1350 = vmatpush1.bf16.msra.mxu0 0
      %1351 = vmatprep.subr.bf16.mxu0 0
      %1352 = vmatpush1.bf16.msra.mxu0 0
      %1353 = vmatprep.subr.bf16.mxu0 0
      %1354 = vmatpush1.bf16.msra.mxu0 0
      %1355 = vmatprep.subr.bf16.mxu0 0
      %1356 = vmatpush1.bf16.msra.mxu0 0
      %1357 = vmatprep.subr.bf16.mxu0 0
      %1358 = vmatpush1.bf16.msra.mxu0 0
      %1359 = vmatprep.subr.bf16.mxu0 0
      %1360 = vmatpush1.bf16.msra.mxu0 0
      %1361 = vmatprep.subr.bf16.mxu0 0
      %1362 = vmatpush1.bf16.msra.mxu0 0
      %1363 = vmatprep.subr.bf16.mxu0 0
      %1364 = vmatpush1.bf16.msra.mxu0 0
      %1365 = vmatprep.subr.bf16.mxu0 0
      %1366 = vmatpush1.bf16.msra.mxu0 0
      %1367 = vmatprep.subr.bf16.mxu0 0
      %1368 = vmatpush1.bf16.msra.mxu0 0
      %1369 = vmatprep.mubr.bf16.mxu0 0
      %1370 = vmatmul.mubr.bf16.gmra.mrb[0].mxu0 %v1285
      %v1371 = vpop.f32.mrb[0].mxu0
      %v1372 = vadd.f32 0.0, %v1371
      %v1373 = vpop.f32.mrb[0].mxu0
      %v1374 = vpop.f32.mrb[0].mxu0
      %v1375 = vpop.f32.mrb[0].mxu0
      %1376 = vdwg.mxu0
      %v1377 = vadd.f32 %v1267, %v1331
      %v1378 = vadd.f32 %v1268, %v1333
      %v1379 = vadd.f32 %v1269, %v1372
      %1380 = vrot.lane.b32.xlu0 %v497, 96
      %v1381 = vpop.permute.xlu0 %1380
      %1382 = vrot.lane.b32.xlu0 %v510, 90
      %v1383 = vpop.permute.xlu0 %1382
      %1384 = vrot.lane.b32.xlu0 %v518, 90
      %v1385 = vpop.permute.xlu0 %1384
      %1386 = vrot.lane.b32.xlu0 %v517, 90
      %v1387 = vpop.permute.xlu0 %1386
      %1388 = vrot.lane.b32.xlu0 %v519, 90
      %v1389 = vpop.permute.xlu0 %1388
      %vm1390 = vcmask 736256
      %v1391 = vsel %vm1390, %v1383, %v1385
      %v1392 = vsel %vm1390, %v1385, %v1387
      %v1393 = vsel %vm1390, %v1387, %v1389
      %v1395 = vsel %vm532, %v1381, 0
      %v1398 = vsel %vm536, %v1391, 0
      %v1401 = vsel %vm536, %v1392, 0
      %v1404 = vsel %vm536, %v1393, 0
      %1406 = vmatprep.subr.bf16.mxu0 %v1401
      %1407 = vmatpush1.bf16.msra.mxu0 %v1398
      %1408 = vmatprep.subr.bf16.mxu0 0
      %1409 = vmatpush1.bf16.msra.mxu0 0
      %1410 = vmatprep.subr.bf16.mxu0 0
      %1411 = vmatpush1.bf16.msra.mxu0 0
      %1412 = vmatprep.subr.bf16.mxu0 0
      %1413 = vmatpush1.bf16.msra.mxu0 0
      %1414 = vmatprep.subr.bf16.mxu0 0
      %1415 = vmatpush1.bf16.msra.mxu0 0
      %1416 = vmatprep.subr.bf16.mxu0 0
      %1417 = vmatpush1.bf16.msra.mxu0 0
      %1418 = vmatprep.subr.bf16.mxu0 0
      %1419 = vmatpush1.bf16.msra.mxu0 0
      %1420 = vmatprep.subr.bf16.mxu0 0
      %1421 = vmatpush1.bf16.msra.mxu0 0
      %1422 = vmatprep.subr.bf16.mxu0 0
      %1423 = vmatpush1.bf16.msra.mxu0 0
      %1424 = vmatprep.subr.bf16.mxu0 0
      %1425 = vmatpush1.bf16.msra.mxu0 0
      %1426 = vmatprep.subr.bf16.mxu0 0
      %1427 = vmatpush1.bf16.msra.mxu0 0
      %1428 = vmatprep.subr.bf16.mxu0 0
      %1429 = vmatpush1.bf16.msra.mxu0 0
      %1430 = vmatprep.subr.bf16.mxu0 0
      %1431 = vmatpush1.bf16.msra.mxu0 0
      %1432 = vmatprep.subr.bf16.mxu0 0
      %1433 = vmatpush1.bf16.msra.mxu0 0
      %1434 = vmatprep.subr.bf16.mxu0 0
      %1435 = vmatpush1.bf16.msra.mxu0 0
      %1436 = vmatprep.subr.bf16.mxu0 0
      %1437 = vmatpush1.bf16.msra.mxu0 0
      %1438 = vmatprep.mubr.bf16.mxu0 0
      %1439 = vmatmul.mubr.bf16.gmra.mrb[0].mxu0 %v1395
      %v1440 = vpop.f32.mrb[0].mxu0
      %v1441 = vadd.f32 0.0, %v1440
      %v1442 = vpop.f32.mrb[0].mxu0
      %v1443 = vadd.f32 0.0, %v1442
      %v1444 = vpop.f32.mrb[0].mxu0
      %v1445 = vpop.f32.mrb[0].mxu0
      %1446 = vdwg.mxu0
      %1447 = vmatprep.subr.bf16.mxu0 0
      %1448 = vmatpush1.bf16.msra.mxu0 %v1404
      %1449 = vmatprep.subr.bf16.mxu0 0
      %1450 = vmatpush1.bf16.msra.mxu0 0
      %1451 = vmatprep.subr.bf16.mxu0 0
      %1452 = vmatpush1.bf16.msra.mxu0 0
      %1453 = vmatprep.subr.bf16.mxu0 0
      %1454 = vmatpush1.bf16.msra.mxu0 0
      %1455 = vmatprep.subr.bf16.mxu0 0
      %1456 = vmatpush1.bf16.msra.mxu0 0
      %1457 = vmatprep.subr.bf16.mxu0 0
      %1458 = vmatpush1.bf16.msra.mxu0 0
      %1459 = vmatprep.subr.bf16.mxu0 0
      %1460 = vmatpush1.bf16.msra.mxu0 0
      %1461 = vmatprep.subr.bf16.mxu0 0
      %1462 = vmatpush1.bf16.msra.mxu0 0
      %1463 = vmatprep.subr.bf16.mxu0 0
      %1464 = vmatpush1.bf16.msra.mxu0 0
      %1465 = vmatprep.subr.bf16.mxu0 0
      %1466 = vmatpush1.bf16.msra.mxu0 0
      %1467 = vmatprep.subr.bf16.mxu0 0
      %1468 = vmatpush1.bf16.msra.mxu0 0
      %1469 = vmatprep.subr.bf16.mxu0 0
      %1470 = vmatpush1.bf16.msra.mxu0 0
      %1471 = vmatprep.subr.bf16.mxu0 0
      %1472 = vmatpush1.bf16.msra.mxu0 0
      %1473 = vmatprep.subr.bf16.mxu0 0
      %1474 = vmatpush1.bf16.msra.mxu0 0
      %1475 = vmatprep.subr.bf16.mxu0 0
      %1476 = vmatpush1.bf16.msra.mxu0 0
      %1477 = vmatprep.subr.bf16.mxu0 0
      %1478 = vmatpush1.bf16.msra.mxu0 0
      %1479 = vmatprep.mubr.bf16.mxu0 0
      %1480 = vmatmul.mubr.bf16.gmra.mrb[0].mxu0 %v1395
      %v1481 = vpop.f32.mrb[0].mxu0
      %v1482 = vadd.f32 0.0, %v1481
      %v1483 = vpop.f32.mrb[0].mxu0
      %v1484 = vpop.f32.mrb[0].mxu0
      %v1485 = vpop.f32.mrb[0].mxu0
      %1486 = vdwg.mxu0
      %v1487 = vadd.f32 %v1377, %v1441
      %v1488 = vadd.f32 %v1378, %v1443
      %v1489 = vadd.f32 %v1379, %v1482
      %v1490 = vld [vmem:[%s3] sm:$0xff]
      %1492 = vset.pattern.permute.xlu0 0
      %1493 = vperm.xlu0 %1492, %v1490
      %v1494 = vpop.permute.xlu0 %1493
      %v1496 = vadd.f32 %v1487, %v1494
      %v1497 = vadd.f32 %v1488, %v1494
      %v1498 = vadd.f32 %v1489, %v1494
      %1499 = vst [vmem:[%s263] sm:$0xff] %v1496
      %1500 = vst [vmem:[%s263 + $0x8] sm:$0xff] %v1497
      %1501 = vst [vmem:[%s263 + $0x10] sm:$0xff] %v1498
      %p1502 = scmp.lt.s32.totalorder %s18, 1
      %s1503 = scalar_select %p1502, %s18, 1
      %s1504 = smul.addr %s1503, 3
      %s1505 = smul.addr %s1504, 8
      %s1506 = scalar_lea.vmem %s4, %s1505
      %p1507 = scmp.lt.s32.totalorder %s18, 1
      %s1508 = scalar_select %p1507, %s18, 1
      %s1509 = smul.addr %s1508, 8
      %s1510 = scalar_lea.vmem %s5, %s1509
      %p1511 = scmp.lt.s32.totalorder %s18, 1
      %s1512 = scalar_select %p1511, %s18, 1
      %s1513 = scalar_lea.vmem %s6, %s1512
      // Predicated region
      $region37: #{spectral_norm_conv2d.1} parent=35 // pred_check
        %p1514 = pneg %p125
      $region38: #{spectral_norm_conv2d.1} parent=35 // pred_check_branch
        %1516 = sbr.rel (%p1514) target = $region40
      $region39: #{spectral_norm_conv2d.1} parent=35 // pred_region
        _
      $region40: #{spectral_norm_conv2d.1} parent=35 // pred_fallthru
        _
      // Predicated region
      $region41: #{spectral_norm_conv2d.1} parent=35 // pred_check
        %p1517 = pneg %p151
      $region42: #{spectral_norm_conv2d.1} parent=35 // pred_check_branch
        %1519 = sbr.rel (%p1517) target = $region44
      $region43: #{spectral_norm_conv2d.1} parent=35 // pred_region
        _
      $region44: #{spectral_norm_conv2d.1} parent=35 // pred_fallthru
        _
      // Predicated region
      $region45: #{spectral_norm_conv2d.1} parent=35 // pred_check
        %p1520 = pneg %p177
      $region46: #{spectral_norm_conv2d.1} parent=35 // pred_check_branch
        %1522 = sbr.rel (%p1520) target = $region48
      $region47: #{spectral_norm_conv2d.1} parent=35 // pred_region
        _
      $region48: #{spectral_norm_conv2d.1} parent=35 // pred_fallthru
        _
    $region36: #{spectral_norm_conv2d.1} parent=5 // pred_fallthru
      _
    %p1523 = scmp.le.s32.totalorder 2, %s13
    // Predicated region
    $region49: #{spectral_norm_conv2d.1} parent=5 // pred_check
      %p1524 = pneg %p1523
    $region50: #{spectral_norm_conv2d.1} parent=5 // pred_check_branch
      %1526 = sbr.rel (%p1524) target = $region52
    $region51: #{spectral_norm_conv2d.1} parent=5 // pred_region
      %s1527 = ssub.s32 %s13, 2
      // Predicated region
      $region53: #{spectral_norm_conv2d.1} parent=51 // pred_check
        %p1528 = pneg %p131
      $region54: #{spectral_norm_conv2d.1} parent=51 // pred_check_branch
        %1530 = sbr.rel (%p1528) target = $region56
      $region55: #{spectral_norm_conv2d.1} parent=51 // pred_region
        %p1531 = scmp.lt.s32.totalorder %s19, 1
        %s1532 = scalar_select %p1531, %s19, 1
        %s1533 = smul.addr %s1532, 3
        %s1534 = smul.addr %s1533, 8
        %s1535 = scalar_lea.vmem %s4, %s1534
      $region56: #{spectral_norm_conv2d.1} parent=51 // pred_fallthru
        _
      // Predicated region
      $region57: #{spectral_norm_conv2d.1} parent=51 // pred_check
        %p1536 = pneg %p157
      $region58: #{spectral_norm_conv2d.1} parent=51 // pred_check_branch
        %1538 = sbr.rel (%p1536) target = $region60
      $region59: #{spectral_norm_conv2d.1} parent=51 // pred_region
        %p1539 = scmp.lt.s32.totalorder %s19, 1
        %s1540 = scalar_select %p1539, %s19, 1
        %s1541 = smul.addr %s1540, 8
        %s1542 = scalar_lea.vmem %s5, %s1541
      $region60: #{spectral_norm_conv2d.1} parent=51 // pred_fallthru
        _
      // Predicated region
      $region61: #{spectral_norm_conv2d.1} parent=51 // pred_check
        %p1543 = pneg %p183
      $region62: #{spectral_norm_conv2d.1} parent=51 // pred_check_branch
        %1545 = sbr.rel (%p1543) target = $region64
      $region63: #{spectral_norm_conv2d.1} parent=51 // pred_region
        %p1546 = scmp.lt.s32.totalorder %s19, 1
        %s1547 = scalar_select %p1546, %s19, 1
        %s1548 = scalar_lea.vmem %s6, %s1547
      $region64: #{spectral_norm_conv2d.1} parent=51 // pred_fallthru
        _
    $region52: #{spectral_norm_conv2d.1} parent=5 // pred_fallthru
      _
  $region6: #{spectral_norm_conv2d.1} parent=0 // loop_footer
    %s17 = sadd.s32 1, %s13
  $region7: #{spectral_norm_conv2d.1} parent=0 // loop_footer_branch
    %12 = sbr.rel target = $region3
  $region8: #{spectral_norm_conv2d.1} parent=0 // loop_exit
    _

</llo_original>
